<compile_context>
chip_gen: v6e
topology: v6e:2x2x1
jax: 0.10.0
libtpu: 0.0.40
codegen_flags: <defaults>
</compile_context>

<pallas_src>
import jax
import jax.numpy as jnp
from jax.experimental import pallas as pl
from jax.experimental.pallas import tpu as pltpu


def _maxpool2x2_kernel(x_ref, o_ref):
    # x_ref: (rows, W) block — rows on the sublane axis, W on the lane axis.
    # o_ref: (rows // 2, W // 2) block.
    x = x_ref[...]
    rows, w = x.shape
    y = x.reshape(rows // 2, 2, w // 2, 2)
    y = jnp.max(y, axis=1)    # H-pair first: cheap sublane-pair max, halves the data
    y = jnp.max(y, axis=-1)   # W-pair second: lane-pair (XLU) max on the halved data
    o_ref[...] = y


def maxpool2x2(x, *, target_block_bytes=8 << 20):
    """2x2 / stride-2 max pool on NCHW input with even H, W. Returns (N, C, H//2, W//2)."""
    n, c, h, w = x.shape
    assert h % 2 == 0 and w % 2 == 0, "MaxPool2x2 kernel expects even spatial dims"

    r = n * c * h                 # total input rows; even because h is even
    x2 = x.reshape(r, w)          # free: NCHW row-major memory is exactly (N*C*H, W)
    itemsize = x.dtype.itemsize

    # Rows per block: large enough to amortize per-grid-step overhead, small enough that the
    # double-buffered input (+ output, 1/4 the size) stays well under VMEM on every generation.
    rows = target_block_bytes // max(1, w * itemsize)
    rows = min(max(rows, 16), r)
    if rows < r:
        rows -= rows % 16         # even H-pairs + sublane-aligned block (f32/bf16 safe)
    grid = (pl.cdiv(r, rows),)

    out2 = pl.pallas_call(
        _maxpool2x2_kernel,
        out_shape=jax.ShapeDtypeStruct((r // 2, w // 2), x.dtype),
        grid=grid,
        in_specs=[pl.BlockSpec((rows, w), lambda i: (i, 0))],
        out_specs=pl.BlockSpec((rows // 2, w // 2), lambda i: (i, 0)),
        compiler_params=pltpu.CompilerParams(
            dimension_semantics=("parallel",),   # v7x: shard the fused row axis across both TCs
            vmem_limit_bytes=32 << 20,           # raise v5e's 16 MiB scoped default; safe on v7x
        ),
        cost_estimate=pl.CostEstimate(
            flops=3 * (r // 2) * (w // 2),       # 3 compares per output element
            transcendentals=0,
            bytes_accessed=r * w * itemsize + (r // 2) * (w // 2) * itemsize,
        ),
    )(x2)
    return out2.reshape(n, c, h // 2, w // 2)


if __name__ == "__main__":
    key = jax.random.PRNGKey(0)

    # Small shape consistent with the module's forward (NCHW).
    N, C, H, W = 2, 4, 16, 16
    x = jax.random.normal(key, (N, C, H, W), dtype=jnp.float32)
    out = jax.block_until_ready(maxpool2x2(x))

    # Pure-JAX reference: same semantics as nn.MaxPool2d(2, stride=2, padding=0) on even dims.
    ref = jnp.max(x.reshape(N, C, H // 2, 2, W // 2, 2), axis=(3, 5))
    assert out.shape == (N, C, H // 2, W // 2)
    assert out.dtype == x.dtype
    assert jnp.array_equal(out, ref)

    # Exercise the multi-block pipelined path (tiny target block forces grid > 1).
    N2, C2, H2, W2 = 2, 4, 64, 32
    x2 = jax.random.normal(jax.random.PRNGKey(0), (N2, C2, H2, W2), dtype=jnp.float32)
    out2 = jax.block_until_ready(maxpool2x2(x2, target_block_bytes=16 * 1024))
    ref2 = jnp.max(x2.reshape(N2, C2, H2 // 2, 2, W2 // 2, 2), axis=(3, 5))
    assert out2.shape == (N2, C2, H2 // 2, W2 // 2)
    assert jnp.array_equal(out2, ref2)

    print("KERNEL_OK")
</pallas_src>

<mosaic_0001>
module attributes {stable_mosaic.version = 11 : i64} {
  func.func @_maxpool2x2_kernel(%arg0: i32, %arg1: memref<128x16xf32, #tpu.memory_space<vmem>>, %arg2: memref<64x8xf32, #tpu.memory_space<vmem>>) attributes {dimension_semantics = [#tpu.dimension_semantics<parallel>], iteration_bounds = array<i64: 1>, scalar_prefetch = 0 : i64, scratch_operands = 0 : i64, tpu.core_type = #tpu.core_type<tc>, window_params = [{transform_indices = @transform_0, window_bounds = array<i64: 128, 16>}, {transform_indices = @transform_1, window_bounds = array<i64: 64, 8>}]} {
    %c0 = arith.constant 0 : index
    %c0_0 = arith.constant 0 : index
    %0 = vector.load %arg1[%c0, %c0_0] : memref<128x16xf32, #tpu.memory_space<vmem>>, vector<128x16xf32>
    %1 = vector.shape_cast %0 : vector<128x16xf32> to vector<64x2x8x2xf32>
    %cst = arith.constant dense<0xFF800000> : vector<64x8x2xf32>
    %2 = vector.multi_reduction <maximumf>, %1, %cst [1] : vector<64x2x8x2xf32> to vector<64x8x2xf32>
    %cst_1 = arith.constant dense<0xFF800000> : vector<64x8xf32>
    %3 = vector.multi_reduction <maximumf>, %2, %cst_1 [2] : vector<64x8x2xf32> to vector<64x8xf32>
    %c0_2 = arith.constant 0 : index
    %c0_3 = arith.constant 0 : index
    %4 = vector.load %arg2[%c0_2, %c0_3] : memref<64x8xf32, #tpu.memory_space<vmem>>, vector<64x8xf32>
    tpu.vector_store %arg2[%c0_2, %c0_3], %3 {strides = array<i32>} : memref<64x8xf32, #tpu.memory_space<vmem>>, vector<64x8xf32>,
    return
  }
  func.func @transform_0(%arg0: i32) -> (i32, i32) {
    %c0_i32 = arith.constant 0 : i32
    %c0_i32_0 = arith.constant 0 : i32
    return %arg0, %c0_i32 : i32, i32
  }
  func.func @transform_1(%arg0: i32) -> (i32, i32) {
    %c0_i32 = arith.constant 0 : i32
    %c0_i32_0 = arith.constant 0 : i32
    return %arg0, %c0_i32 : i32, i32
  }
}

</mosaic_0001>

<llo_original>
// kernel: tpu_custom_call.1
$region0: #{tpu_custom_call.1}
  #allocation0 [shape = 'u32[]', space=smem, size = 0x4, offset = 0x4, fixed_abs, tag = 'smem constant byte address 0x4 - core index']
  #allocation1 [shape = 'u32[144,128]{1,0:T(1,128)}', space=vmem, size = 0x12000, scoped, tag = 'internal scratch']
  %s0 = inlined_call_operand.vmem [shape: f32[128,16], index: 0, kind: input, shape index: {}]
  %s1 = inlined_call_operand.vmem [shape: f32[64,8], index: 1, kind: output, shape index: {}]
  %s2 = sld [smem:[#allocation0]]
  $region14: #{tpu_custom_call.1} parent=0
    _
  %s4 = ssub.s32 1, %s2
  %s5 = scalar_select 0, %s4, %s2
  // Predicated region
  $region2: #{tpu_custom_call.1} parent=0 // pred_check
    _
  $region3: #{tpu_custom_call.1} parent=0 // pred_check_branch
    %7 = sbr.rel (0) target = $region5
  $region4: #{tpu_custom_call.1} parent=0 // pred_region
    _
  $region5: #{tpu_custom_call.1} parent=0 // pred_fallthru
    _
  %v8 = vld [vmem:[%s0] sm:$0xff]
  %v9 = vld [vmem:[%s0 + $0x8] sm:$0xff]
  %v10 = vld [vmem:[%s0 + $0x10] sm:$0xff]
  %v11 = vld [vmem:[%s0 + $0x18] sm:$0xff]
  %v12 = vld [vmem:[%s0 + $0x20] sm:$0xff]
  %v13 = vld [vmem:[%s0 + $0x28] sm:$0xff]
  %v14 = vld [vmem:[%s0 + $0x30] sm:$0xff]
  %v15 = vld [vmem:[%s0 + $0x38] sm:$0xff]
  %v16 = vld [vmem:[%s0 + $0x40] sm:$0xff]
  %v17 = vld [vmem:[%s0 + $0x48] sm:$0xff]
  %v18 = vld [vmem:[%s0 + $0x50] sm:$0xff]
  %v19 = vld [vmem:[%s0 + $0x58] sm:$0xff]
  %v20 = vld [vmem:[%s0 + $0x60] sm:$0xff]
  %v21 = vld [vmem:[%s0 + $0x68] sm:$0xff]
  %v22 = vld [vmem:[%s0 + $0x70] sm:$0xff]
  %v23 = vld [vmem:[%s0 + $0x78] sm:$0xff]
  %40 = vrot.lane.b32.xlu0 %v8, 126
  %v41 = vpop.permute.xlu0 %40
  %42 = vrot.lane.b32.xlu0 %v9, 126
  %v43 = vpop.permute.xlu0 %42
  %44 = vrot.lane.b32.xlu0 %v10, 126
  %v45 = vpop.permute.xlu0 %44
  %46 = vrot.lane.b32.xlu0 %v11, 126
  %v47 = vpop.permute.xlu0 %46
  %48 = vrot.lane.b32.xlu0 %v12, 126
  %v49 = vpop.permute.xlu0 %48
  %50 = vrot.lane.b32.xlu0 %v13, 126
  %v51 = vpop.permute.xlu0 %50
  %52 = vrot.lane.b32.xlu0 %v14, 126
  %v53 = vpop.permute.xlu0 %52
  %54 = vrot.lane.b32.xlu0 %v15, 126
  %v55 = vpop.permute.xlu0 %54
  %56 = vrot.lane.b32.xlu0 %v16, 126
  %v57 = vpop.permute.xlu0 %56
  %58 = vrot.lane.b32.xlu0 %v17, 126
  %v59 = vpop.permute.xlu0 %58
  %60 = vrot.lane.b32.xlu0 %v18, 126
  %v61 = vpop.permute.xlu0 %60
  %62 = vrot.lane.b32.xlu0 %v19, 126
  %v63 = vpop.permute.xlu0 %62
  %64 = vrot.lane.b32.xlu0 %v20, 126
  %v65 = vpop.permute.xlu0 %64
  %66 = vrot.lane.b32.xlu0 %v21, 126
  %v67 = vpop.permute.xlu0 %66
  %68 = vrot.lane.b32.xlu0 %v22, 126
  %v69 = vpop.permute.xlu0 %68
  %70 = vrot.lane.b32.xlu0 %v23, 126
  %v71 = vpop.permute.xlu0 %70
  %88 = vrot.lane.b32.xlu0 %v8, 124
  %v89 = vpop.permute.xlu0 %88
  %90 = vrot.lane.b32.xlu0 %v9, 124
  %v91 = vpop.permute.xlu0 %90
  %92 = vrot.lane.b32.xlu0 %v10, 124
  %v93 = vpop.permute.xlu0 %92
  %94 = vrot.lane.b32.xlu0 %v11, 124
  %v95 = vpop.permute.xlu0 %94
  %96 = vrot.lane.b32.xlu0 %v12, 124
  %v97 = vpop.permute.xlu0 %96
  %98 = vrot.lane.b32.xlu0 %v13, 124
  %v99 = vpop.permute.xlu0 %98
  %100 = vrot.lane.b32.xlu0 %v14, 124
  %v101 = vpop.permute.xlu0 %100
  %102 = vrot.lane.b32.xlu0 %v15, 124
  %v103 = vpop.permute.xlu0 %102
  %104 = vrot.lane.b32.xlu0 %v16, 124
  %v105 = vpop.permute.xlu0 %104
  %106 = vrot.lane.b32.xlu0 %v17, 124
  %v107 = vpop.permute.xlu0 %106
  %108 = vrot.lane.b32.xlu0 %v18, 124
  %v109 = vpop.permute.xlu0 %108
  %110 = vrot.lane.b32.xlu0 %v19, 124
  %v111 = vpop.permute.xlu0 %110
  %112 = vrot.lane.b32.xlu0 %v20, 124
  %v113 = vpop.permute.xlu0 %112
  %114 = vrot.lane.b32.xlu0 %v21, 124
  %v115 = vpop.permute.xlu0 %114
  %116 = vrot.lane.b32.xlu0 %v22, 124
  %v117 = vpop.permute.xlu0 %116
  %118 = vrot.lane.b32.xlu0 %v23, 124
  %v119 = vpop.permute.xlu0 %118
  %136 = vrot.lane.b32.xlu0 %v8, 122
  %v137 = vpop.permute.xlu0 %136
  %138 = vrot.lane.b32.xlu0 %v9, 122
  %v139 = vpop.permute.xlu0 %138
  %140 = vrot.lane.b32.xlu0 %v10, 122
  %v141 = vpop.permute.xlu0 %140
  %142 = vrot.lane.b32.xlu0 %v11, 122
  %v143 = vpop.permute.xlu0 %142
  %144 = vrot.lane.b32.xlu0 %v12, 122
  %v145 = vpop.permute.xlu0 %144
  %146 = vrot.lane.b32.xlu0 %v13, 122
  %v147 = vpop.permute.xlu0 %146
  %148 = vrot.lane.b32.xlu0 %v14, 122
  %v149 = vpop.permute.xlu0 %148
  %150 = vrot.lane.b32.xlu0 %v15, 122
  %v151 = vpop.permute.xlu0 %150
  %152 = vrot.lane.b32.xlu0 %v16, 122
  %v153 = vpop.permute.xlu0 %152
  %154 = vrot.lane.b32.xlu0 %v17, 122
  %v155 = vpop.permute.xlu0 %154
  %156 = vrot.lane.b32.xlu0 %v18, 122
  %v157 = vpop.permute.xlu0 %156
  %158 = vrot.lane.b32.xlu0 %v19, 122
  %v159 = vpop.permute.xlu0 %158
  %160 = vrot.lane.b32.xlu0 %v20, 122
  %v161 = vpop.permute.xlu0 %160
  %162 = vrot.lane.b32.xlu0 %v21, 122
  %v163 = vpop.permute.xlu0 %162
  %164 = vrot.lane.b32.xlu0 %v22, 122
  %v165 = vpop.permute.xlu0 %164
  %166 = vrot.lane.b32.xlu0 %v23, 122
  %v167 = vpop.permute.xlu0 %166
  %184 = vrot.lane.b32.xlu0 %v8, 120
  %v185 = vpop.permute.xlu0 %184
  %186 = vrot.lane.b32.xlu0 %v9, 120
  %v187 = vpop.permute.xlu0 %186
  %188 = vrot.lane.b32.xlu0 %v10, 120
  %v189 = vpop.permute.xlu0 %188
  %190 = vrot.lane.b32.xlu0 %v11, 120
  %v191 = vpop.permute.xlu0 %190
  %192 = vrot.lane.b32.xlu0 %v12, 120
  %v193 = vpop.permute.xlu0 %192
  %194 = vrot.lane.b32.xlu0 %v13, 120
  %v195 = vpop.permute.xlu0 %194
  %196 = vrot.lane.b32.xlu0 %v14, 120
  %v197 = vpop.permute.xlu0 %196
  %198 = vrot.lane.b32.xlu0 %v15, 120
  %v199 = vpop.permute.xlu0 %198
  %200 = vrot.lane.b32.xlu0 %v16, 120
  %v201 = vpop.permute.xlu0 %200
  %202 = vrot.lane.b32.xlu0 %v17, 120
  %v203 = vpop.permute.xlu0 %202
  %204 = vrot.lane.b32.xlu0 %v18, 120
  %v205 = vpop.permute.xlu0 %204
  %206 = vrot.lane.b32.xlu0 %v19, 120
  %v207 = vpop.permute.xlu0 %206
  %208 = vrot.lane.b32.xlu0 %v20, 120
  %v209 = vpop.permute.xlu0 %208
  %210 = vrot.lane.b32.xlu0 %v21, 120
  %v211 = vpop.permute.xlu0 %210
  %212 = vrot.lane.b32.xlu0 %v22, 120
  %v213 = vpop.permute.xlu0 %212
  %214 = vrot.lane.b32.xlu0 %v23, 120
  %v215 = vpop.permute.xlu0 %214
  %232 = vrot.lane.b32.xlu0 %v8, 118
  %v233 = vpop.permute.xlu0 %232
  %234 = vrot.lane.b32.xlu0 %v9, 118
  %v235 = vpop.permute.xlu0 %234
  %236 = vrot.lane.b32.xlu0 %v10, 118
  %v237 = vpop.permute.xlu0 %236
  %238 = vrot.lane.b32.xlu0 %v11, 118
  %v239 = vpop.permute.xlu0 %238
  %240 = vrot.lane.b32.xlu0 %v12, 118
  %v241 = vpop.permute.xlu0 %240
  %242 = vrot.lane.b32.xlu0 %v13, 118
  %v243 = vpop.permute.xlu0 %242
  %244 = vrot.lane.b32.xlu0 %v14, 118
  %v245 = vpop.permute.xlu0 %244
  %246 = vrot.lane.b32.xlu0 %v15, 118
  %v247 = vpop.permute.xlu0 %246
  %248 = vrot.lane.b32.xlu0 %v16, 118
  %v249 = vpop.permute.xlu0 %248
  %250 = vrot.lane.b32.xlu0 %v17, 118
  %v251 = vpop.permute.xlu0 %250
  %252 = vrot.lane.b32.xlu0 %v18, 118
  %v253 = vpop.permute.xlu0 %252
  %254 = vrot.lane.b32.xlu0 %v19, 118
  %v255 = vpop.permute.xlu0 %254
  %256 = vrot.lane.b32.xlu0 %v20, 118
  %v257 = vpop.permute.xlu0 %256
  %258 = vrot.lane.b32.xlu0 %v21, 118
  %v259 = vpop.permute.xlu0 %258
  %260 = vrot.lane.b32.xlu0 %v22, 118
  %v261 = vpop.permute.xlu0 %260
  %262 = vrot.lane.b32.xlu0 %v23, 118
  %v263 = vpop.permute.xlu0 %262
  %280 = vrot.lane.b32.xlu0 %v8, 116
  %v281 = vpop.permute.xlu0 %280
  %282 = vrot.lane.b32.xlu0 %v9, 116
  %v283 = vpop.permute.xlu0 %282
  %284 = vrot.lane.b32.xlu0 %v10, 116
  %v285 = vpop.permute.xlu0 %284
  %286 = vrot.lane.b32.xlu0 %v11, 116
  %v287 = vpop.permute.xlu0 %286
  %288 = vrot.lane.b32.xlu0 %v12, 116
  %v289 = vpop.permute.xlu0 %288
  %290 = vrot.lane.b32.xlu0 %v13, 116
  %v291 = vpop.permute.xlu0 %290
  %292 = vrot.lane.b32.xlu0 %v14, 116
  %v293 = vpop.permute.xlu0 %292
  %294 = vrot.lane.b32.xlu0 %v15, 116
  %v295 = vpop.permute.xlu0 %294
  %296 = vrot.lane.b32.xlu0 %v16, 116
  %v297 = vpop.permute.xlu0 %296
  %298 = vrot.lane.b32.xlu0 %v17, 116
  %v299 = vpop.permute.xlu0 %298
  %300 = vrot.lane.b32.xlu0 %v18, 116
  %v301 = vpop.permute.xlu0 %300
  %302 = vrot.lane.b32.xlu0 %v19, 116
  %v303 = vpop.permute.xlu0 %302
  %304 = vrot.lane.b32.xlu0 %v20, 116
  %v305 = vpop.permute.xlu0 %304
  %306 = vrot.lane.b32.xlu0 %v21, 116
  %v307 = vpop.permute.xlu0 %306
  %308 = vrot.lane.b32.xlu0 %v22, 116
  %v309 = vpop.permute.xlu0 %308
  %310 = vrot.lane.b32.xlu0 %v23, 116
  %v311 = vpop.permute.xlu0 %310
  %328 = vrot.lane.b32.xlu0 %v8, 114
  %v329 = vpop.permute.xlu0 %328
  %330 = vrot.lane.b32.xlu0 %v9, 114
  %v331 = vpop.permute.xlu0 %330
  %332 = vrot.lane.b32.xlu0 %v10, 114
  %v333 = vpop.permute.xlu0 %332
  %334 = vrot.lane.b32.xlu0 %v11, 114
  %v335 = vpop.permute.xlu0 %334
  %336 = vrot.lane.b32.xlu0 %v12, 114
  %v337 = vpop.permute.xlu0 %336
  %338 = vrot.lane.b32.xlu0 %v13, 114
  %v339 = vpop.permute.xlu0 %338
  %340 = vrot.lane.b32.xlu0 %v14, 114
  %v341 = vpop.permute.xlu0 %340
  %342 = vrot.lane.b32.xlu0 %v15, 114
  %v343 = vpop.permute.xlu0 %342
  %344 = vrot.lane.b32.xlu0 %v16, 114
  %v345 = vpop.permute.xlu0 %344
  %346 = vrot.lane.b32.xlu0 %v17, 114
  %v347 = vpop.permute.xlu0 %346
  %348 = vrot.lane.b32.xlu0 %v18, 114
  %v349 = vpop.permute.xlu0 %348
  %350 = vrot.lane.b32.xlu0 %v19, 114
  %v351 = vpop.permute.xlu0 %350
  %352 = vrot.lane.b32.xlu0 %v20, 114
  %v353 = vpop.permute.xlu0 %352
  %354 = vrot.lane.b32.xlu0 %v21, 114
  %v355 = vpop.permute.xlu0 %354
  %356 = vrot.lane.b32.xlu0 %v22, 114
  %v357 = vpop.permute.xlu0 %356
  %358 = vrot.lane.b32.xlu0 %v23, 114
  %v359 = vpop.permute.xlu0 %358
  %v376 = vcombine.low %v8, %v89
  %v377 = vcombine.high %v8, %v89
  %v379 = vunpack.c.l.s4 1983009808
  %v380 = vunpack.c.0.s8 %v379
  %v381 = vlaneseq
  %v382 = vshrl.u32 %v381, 7
  %v383 = vsub.s32 %v380, %v382
  %v384 = vrot.slane %v376, %v383
  %v386 = vunpack.c.l.s4 1983009808
  %v387 = vunpack.c.0.s8 %v386
  %v388 = vlaneseq
  %v389 = vshrl.u32 %v388, 7
  %v390 = vsub.s32 %v387, %v389
  %v391 = vrot.slane %v377, %v390
  %v392 = vcombine.low %v41, %v137
  %v393 = vcombine.high %v41, %v137
  %v395 = vunpack.c.l.s4 1983009808
  %v396 = vunpack.c.0.s8 %v395
  %v397 = vlaneseq
  %v398 = vshrl.u32 %v397, 7
  %v399 = vsub.s32 %v396, %v398
  %v400 = vrot.slane %v392, %v399
  %v402 = vunpack.c.l.s4 1983009808
  %v403 = vunpack.c.0.s8 %v402
  %v404 = vlaneseq
  %v405 = vshrl.u32 %v404, 7
  %v406 = vsub.s32 %v403, %v405
  %v407 = vrot.slane %v393, %v406
  %v408 = vcombine.low %v185, %v281
  %v409 = vcombine.high %v185, %v281
  %v411 = vunpack.c.l.s4 1983009808
  %v412 = vunpack.c.0.s8 %v411
  %v413 = vlaneseq
  %v414 = vshrl.u32 %v413, 7
  %v415 = vsub.s32 %v412, %v414
  %v416 = vrot.slane %v408, %v415
  %v418 = vunpack.c.l.s4 1983009808
  %v419 = vunpack.c.0.s8 %v418
  %v420 = vlaneseq
  %v421 = vshrl.u32 %v420, 7
  %v422 = vsub.s32 %v419, %v421
  %v423 = vrot.slane %v409, %v422
  %v424 = vcombine.low %v233, %v329
  %v425 = vcombine.high %v233, %v329
  %v427 = vunpack.c.l.s4 1983009808
  %v428 = vunpack.c.0.s8 %v427
  %v429 = vlaneseq
  %v430 = vshrl.u32 %v429, 7
  %v431 = vsub.s32 %v428, %v430
  %v432 = vrot.slane %v424, %v431
  %v434 = vunpack.c.l.s4 1983009808
  %v435 = vunpack.c.0.s8 %v434
  %v436 = vlaneseq
  %v437 = vshrl.u32 %v436, 7
  %v438 = vsub.s32 %v435, %v437
  %v439 = vrot.slane %v425, %v438
  %v440 = vcombine.low %v384, %v400
  %v441 = vcombine.high %v384, %v400
  %v443 = vunpack.c.l.s4 1934713408
  %v444 = vunpack.c.0.s8 %v443
  %v445 = vlaneseq
  %v446 = vshrl.u32 %v445, 7
  %v447 = vsub.s32 %v444, %v446
  %v448 = vrot.slane %v440, %v447
  %v450 = vunpack.c.l.s4 1934713408
  %v451 = vunpack.c.0.s8 %v450
  %v452 = vlaneseq
  %v453 = vshrl.u32 %v452, 7
  %v454 = vsub.s32 %v451, %v453
  %v455 = vrot.slane %v441, %v454
  %v456 = vcombine.low %v391, %v407
  %v457 = vcombine.high %v391, %v407
  %v459 = vunpack.c.l.s4 1934713408
  %v460 = vunpack.c.0.s8 %v459
  %v461 = vlaneseq
  %v462 = vshrl.u32 %v461, 7
  %v463 = vsub.s32 %v460, %v462
  %v464 = vrot.slane %v456, %v463
  %v466 = vunpack.c.l.s4 1934713408
  %v467 = vunpack.c.0.s8 %v466
  %v468 = vlaneseq
  %v469 = vshrl.u32 %v468, 7
  %v470 = vsub.s32 %v467, %v469
  %v471 = vrot.slane %v457, %v470
  %v472 = vcombine.low %v416, %v432
  %v473 = vcombine.high %v416, %v432
  %v475 = vunpack.c.l.s4 1934713408
  %v476 = vunpack.c.0.s8 %v475
  %v477 = vlaneseq
  %v478 = vshrl.u32 %v477, 7
  %v479 = vsub.s32 %v476, %v478
  %v480 = vrot.slane %v472, %v479
  %v482 = vunpack.c.l.s4 1934713408
  %v483 = vunpack.c.0.s8 %v482
  %v484 = vlaneseq
  %v485 = vshrl.u32 %v484, 7
  %v486 = vsub.s32 %v483, %v485
  %v487 = vrot.slane %v473, %v486
  %v488 = vcombine.low %v423, %v439
  %v489 = vcombine.high %v423, %v439
  %v491 = vunpack.c.l.s4 1934713408
  %v492 = vunpack.c.0.s8 %v491
  %v493 = vlaneseq
  %v494 = vshrl.u32 %v493, 7
  %v495 = vsub.s32 %v492, %v494
  %v496 = vrot.slane %v488, %v495
  %v498 = vunpack.c.l.s4 1934713408
  %v499 = vunpack.c.0.s8 %v498
  %v500 = vlaneseq
  %v501 = vshrl.u32 %v500, 7
  %v502 = vsub.s32 %v499, %v501
  %v503 = vrot.slane %v489, %v502
  %v504 = vcombine.low %v448, %v480
  %v505 = vcombine.high %v448, %v480
  %v506 = vcombine.low %v455, %v487
  %v507 = vcombine.high %v455, %v487
  %v508 = vcombine.low %v464, %v496
  %v509 = vcombine.high %v464, %v496
  %v510 = vcombine.low %v471, %v503
  %v511 = vcombine.high %v471, %v503
  %v512 = vcombine.low %v9, %v91
  %v513 = vcombine.high %v9, %v91
  %v515 = vunpack.c.l.s4 1983009808
  %v516 = vunpack.c.0.s8 %v515
  %v517 = vlaneseq
  %v518 = vshrl.u32 %v517, 7
  %v519 = vsub.s32 %v516, %v518
  %v520 = vrot.slane %v512, %v519
  %v522 = vunpack.c.l.s4 1983009808
  %v523 = vunpack.c.0.s8 %v522
  %v524 = vlaneseq
  %v525 = vshrl.u32 %v524, 7
  %v526 = vsub.s32 %v523, %v525
  %v527 = vrot.slane %v513, %v526
  %v528 = vcombine.low %v43, %v139
  %v529 = vcombine.high %v43, %v139
  %v531 = vunpack.c.l.s4 1983009808
  %v532 = vunpack.c.0.s8 %v531
  %v533 = vlaneseq
  %v534 = vshrl.u32 %v533, 7
  %v535 = vsub.s32 %v532, %v534
  %v536 = vrot.slane %v528, %v535
  %v538 = vunpack.c.l.s4 1983009808
  %v539 = vunpack.c.0.s8 %v538
  %v540 = vlaneseq
  %v541 = vshrl.u32 %v540, 7
  %v542 = vsub.s32 %v539, %v541
  %v543 = vrot.slane %v529, %v542
  %v544 = vcombine.low %v187, %v283
  %v545 = vcombine.high %v187, %v283
  %v547 = vunpack.c.l.s4 1983009808
  %v548 = vunpack.c.0.s8 %v547
  %v549 = vlaneseq
  %v550 = vshrl.u32 %v549, 7
  %v551 = vsub.s32 %v548, %v550
  %v552 = vrot.slane %v544, %v551
  %v554 = vunpack.c.l.s4 1983009808
  %v555 = vunpack.c.0.s8 %v554
  %v556 = vlaneseq
  %v557 = vshrl.u32 %v556, 7
  %v558 = vsub.s32 %v555, %v557
  %v559 = vrot.slane %v545, %v558
  %v560 = vcombine.low %v235, %v331
  %v561 = vcombine.high %v235, %v331
  %v563 = vunpack.c.l.s4 1983009808
  %v564 = vunpack.c.0.s8 %v563
  %v565 = vlaneseq
  %v566 = vshrl.u32 %v565, 7
  %v567 = vsub.s32 %v564, %v566
  %v568 = vrot.slane %v560, %v567
  %v570 = vunpack.c.l.s4 1983009808
  %v571 = vunpack.c.0.s8 %v570
  %v572 = vlaneseq
  %v573 = vshrl.u32 %v572, 7
  %v574 = vsub.s32 %v571, %v573
  %v575 = vrot.slane %v561, %v574
  %v576 = vcombine.low %v520, %v536
  %v577 = vcombine.high %v520, %v536
  %v579 = vunpack.c.l.s4 1934713408
  %v580 = vunpack.c.0.s8 %v579
  %v581 = vlaneseq
  %v582 = vshrl.u32 %v581, 7
  %v583 = vsub.s32 %v580, %v582
  %v584 = vrot.slane %v576, %v583
  %v586 = vunpack.c.l.s4 1934713408
  %v587 = vunpack.c.0.s8 %v586
  %v588 = vlaneseq
  %v589 = vshrl.u32 %v588, 7
  %v590 = vsub.s32 %v587, %v589
  %v591 = vrot.slane %v577, %v590
  %v592 = vcombine.low %v527, %v543
  %v593 = vcombine.high %v527, %v543
  %v595 = vunpack.c.l.s4 1934713408
  %v596 = vunpack.c.0.s8 %v595
  %v597 = vlaneseq
  %v598 = vshrl.u32 %v597, 7
  %v599 = vsub.s32 %v596, %v598
  %v600 = vrot.slane %v592, %v599
  %v602 = vunpack.c.l.s4 1934713408
  %v603 = vunpack.c.0.s8 %v602
  %v604 = vlaneseq
  %v605 = vshrl.u32 %v604, 7
  %v606 = vsub.s32 %v603, %v605
  %v607 = vrot.slane %v593, %v606
  %v608 = vcombine.low %v552, %v568
  %v609 = vcombine.high %v552, %v568
  %v611 = vunpack.c.l.s4 1934713408
  %v612 = vunpack.c.0.s8 %v611
  %v613 = vlaneseq
  %v614 = vshrl.u32 %v613, 7
  %v615 = vsub.s32 %v612, %v614
  %v616 = vrot.slane %v608, %v615
  %v618 = vunpack.c.l.s4 1934713408
  %v619 = vunpack.c.0.s8 %v618
  %v620 = vlaneseq
  %v621 = vshrl.u32 %v620, 7
  %v622 = vsub.s32 %v619, %v621
  %v623 = vrot.slane %v609, %v622
  %v624 = vcombine.low %v559, %v575
  %v625 = vcombine.high %v559, %v575
  %v627 = vunpack.c.l.s4 1934713408
  %v628 = vunpack.c.0.s8 %v627
  %v629 = vlaneseq
  %v630 = vshrl.u32 %v629, 7
  %v631 = vsub.s32 %v628, %v630
  %v632 = vrot.slane %v624, %v631
  %v634 = vunpack.c.l.s4 1934713408
  %v635 = vunpack.c.0.s8 %v634
  %v636 = vlaneseq
  %v637 = vshrl.u32 %v636, 7
  %v638 = vsub.s32 %v635, %v637
  %v639 = vrot.slane %v625, %v638
  %v640 = vcombine.low %v584, %v616
  %v641 = vcombine.high %v584, %v616
  %v642 = vcombine.low %v591, %v623
  %v643 = vcombine.high %v591, %v623
  %v644 = vcombine.low %v600, %v632
  %v645 = vcombine.high %v600, %v632
  %v646 = vcombine.low %v607, %v639
  %v647 = vcombine.high %v607, %v639
  %v648 = vcombine.low %v10, %v93
  %v649 = vcombine.high %v10, %v93
  %v651 = vunpack.c.l.s4 1983009808
  %v652 = vunpack.c.0.s8 %v651
  %v653 = vlaneseq
  %v654 = vshrl.u32 %v653, 7
  %v655 = vsub.s32 %v652, %v654
  %v656 = vrot.slane %v648, %v655
  %v658 = vunpack.c.l.s4 1983009808
  %v659 = vunpack.c.0.s8 %v658
  %v660 = vlaneseq
  %v661 = vshrl.u32 %v660, 7
  %v662 = vsub.s32 %v659, %v661
  %v663 = vrot.slane %v649, %v662
  %v664 = vcombine.low %v45, %v141
  %v665 = vcombine.high %v45, %v141
  %v667 = vunpack.c.l.s4 1983009808
  %v668 = vunpack.c.0.s8 %v667
  %v669 = vlaneseq
  %v670 = vshrl.u32 %v669, 7
  %v671 = vsub.s32 %v668, %v670
  %v672 = vrot.slane %v664, %v671
  %v674 = vunpack.c.l.s4 1983009808
  %v675 = vunpack.c.0.s8 %v674
  %v676 = vlaneseq
  %v677 = vshrl.u32 %v676, 7
  %v678 = vsub.s32 %v675, %v677
  %v679 = vrot.slane %v665, %v678
  %v680 = vcombine.low %v189, %v285
  %v681 = vcombine.high %v189, %v285
  %v683 = vunpack.c.l.s4 1983009808
  %v684 = vunpack.c.0.s8 %v683
  %v685 = vlaneseq
  %v686 = vshrl.u32 %v685, 7
  %v687 = vsub.s32 %v684, %v686
  %v688 = vrot.slane %v680, %v687
  %v690 = vunpack.c.l.s4 1983009808
  %v691 = vunpack.c.0.s8 %v690
  %v692 = vlaneseq
  %v693 = vshrl.u32 %v692, 7
  %v694 = vsub.s32 %v691, %v693
  %v695 = vrot.slane %v681, %v694
  %v696 = vcombine.low %v237, %v333
  %v697 = vcombine.high %v237, %v333
  %v699 = vunpack.c.l.s4 1983009808
  %v700 = vunpack.c.0.s8 %v699
  %v701 = vlaneseq
  %v702 = vshrl.u32 %v701, 7
  %v703 = vsub.s32 %v700, %v702
  %v704 = vrot.slane %v696, %v703
  %v706 = vunpack.c.l.s4 1983009808
  %v707 = vunpack.c.0.s8 %v706
  %v708 = vlaneseq
  %v709 = vshrl.u32 %v708, 7
  %v710 = vsub.s32 %v707, %v709
  %v711 = vrot.slane %v697, %v710
  %v712 = vcombine.low %v656, %v672
  %v713 = vcombine.high %v656, %v672
  %v715 = vunpack.c.l.s4 1934713408
  %v716 = vunpack.c.0.s8 %v715
  %v717 = vlaneseq
  %v718 = vshrl.u32 %v717, 7
  %v719 = vsub.s32 %v716, %v718
  %v720 = vrot.slane %v712, %v719
  %v722 = vunpack.c.l.s4 1934713408
  %v723 = vunpack.c.0.s8 %v722
  %v724 = vlaneseq
  %v725 = vshrl.u32 %v724, 7
  %v726 = vsub.s32 %v723, %v725
  %v727 = vrot.slane %v713, %v726
  %v728 = vcombine.low %v663, %v679
  %v729 = vcombine.high %v663, %v679
  %v731 = vunpack.c.l.s4 1934713408
  %v732 = vunpack.c.0.s8 %v731
  %v733 = vlaneseq
  %v734 = vshrl.u32 %v733, 7
  %v735 = vsub.s32 %v732, %v734
  %v736 = vrot.slane %v728, %v735
  %v738 = vunpack.c.l.s4 1934713408
  %v739 = vunpack.c.0.s8 %v738
  %v740 = vlaneseq
  %v741 = vshrl.u32 %v740, 7
  %v742 = vsub.s32 %v739, %v741
  %v743 = vrot.slane %v729, %v742
  %v744 = vcombine.low %v688, %v704
  %v745 = vcombine.high %v688, %v704
  %v747 = vunpack.c.l.s4 1934713408
  %v748 = vunpack.c.0.s8 %v747
  %v749 = vlaneseq
  %v750 = vshrl.u32 %v749, 7
  %v751 = vsub.s32 %v748, %v750
  %v752 = vrot.slane %v744, %v751
  %v754 = vunpack.c.l.s4 1934713408
  %v755 = vunpack.c.0.s8 %v754
  %v756 = vlaneseq
  %v757 = vshrl.u32 %v756, 7
  %v758 = vsub.s32 %v755, %v757
  %v759 = vrot.slane %v745, %v758
  %v760 = vcombine.low %v695, %v711
  %v761 = vcombine.high %v695, %v711
  %v763 = vunpack.c.l.s4 1934713408
  %v764 = vunpack.c.0.s8 %v763
  %v765 = vlaneseq
  %v766 = vshrl.u32 %v765, 7
  %v767 = vsub.s32 %v764, %v766
  %v768 = vrot.slane %v760, %v767
  %v770 = vunpack.c.l.s4 1934713408
  %v771 = vunpack.c.0.s8 %v770
  %v772 = vlaneseq
  %v773 = vshrl.u32 %v772, 7
  %v774 = vsub.s32 %v771, %v773
  %v775 = vrot.slane %v761, %v774
  %v776 = vcombine.low %v720, %v752
  %v777 = vcombine.high %v720, %v752
  %v778 = vcombine.low %v727, %v759
  %v779 = vcombine.high %v727, %v759
  %v780 = vcombine.low %v736, %v768
  %v781 = vcombine.high %v736, %v768
  %v782 = vcombine.low %v743, %v775
  %v783 = vcombine.high %v743, %v775
  %v784 = vcombine.low %v11, %v95
  %v785 = vcombine.high %v11, %v95
  %v787 = vunpack.c.l.s4 1983009808
  %v788 = vunpack.c.0.s8 %v787
  %v789 = vlaneseq
  %v790 = vshrl.u32 %v789, 7
  %v791 = vsub.s32 %v788, %v790
  %v792 = vrot.slane %v784, %v791
  %v794 = vunpack.c.l.s4 1983009808
  %v795 = vunpack.c.0.s8 %v794
  %v796 = vlaneseq
  %v797 = vshrl.u32 %v796, 7
  %v798 = vsub.s32 %v795, %v797
  %v799 = vrot.slane %v785, %v798
  %v800 = vcombine.low %v47, %v143
  %v801 = vcombine.high %v47, %v143
  %v803 = vunpack.c.l.s4 1983009808
  %v804 = vunpack.c.0.s8 %v803
  %v805 = vlaneseq
  %v806 = vshrl.u32 %v805, 7
  %v807 = vsub.s32 %v804, %v806
  %v808 = vrot.slane %v800, %v807
  %v810 = vunpack.c.l.s4 1983009808
  %v811 = vunpack.c.0.s8 %v810
  %v812 = vlaneseq
  %v813 = vshrl.u32 %v812, 7
  %v814 = vsub.s32 %v811, %v813
  %v815 = vrot.slane %v801, %v814
  %v816 = vcombine.low %v191, %v287
  %v817 = vcombine.high %v191, %v287
  %v819 = vunpack.c.l.s4 1983009808
  %v820 = vunpack.c.0.s8 %v819
  %v821 = vlaneseq
  %v822 = vshrl.u32 %v821, 7
  %v823 = vsub.s32 %v820, %v822
  %v824 = vrot.slane %v816, %v823
  %v826 = vunpack.c.l.s4 1983009808
  %v827 = vunpack.c.0.s8 %v826
  %v828 = vlaneseq
  %v829 = vshrl.u32 %v828, 7
  %v830 = vsub.s32 %v827, %v829
  %v831 = vrot.slane %v817, %v830
  %v832 = vcombine.low %v239, %v335
  %v833 = vcombine.high %v239, %v335
  %v835 = vunpack.c.l.s4 1983009808
  %v836 = vunpack.c.0.s8 %v835
  %v837 = vlaneseq
  %v838 = vshrl.u32 %v837, 7
  %v839 = vsub.s32 %v836, %v838
  %v840 = vrot.slane %v832, %v839
  %v842 = vunpack.c.l.s4 1983009808
  %v843 = vunpack.c.0.s8 %v842
  %v844 = vlaneseq
  %v845 = vshrl.u32 %v844, 7
  %v846 = vsub.s32 %v843, %v845
  %v847 = vrot.slane %v833, %v846
  %v848 = vcombine.low %v792, %v808
  %v849 = vcombine.high %v792, %v808
  %v851 = vunpack.c.l.s4 1934713408
  %v852 = vunpack.c.0.s8 %v851
  %v853 = vlaneseq
  %v854 = vshrl.u32 %v853, 7
  %v855 = vsub.s32 %v852, %v854
  %v856 = vrot.slane %v848, %v855
  %v858 = vunpack.c.l.s4 1934713408
  %v859 = vunpack.c.0.s8 %v858
  %v860 = vlaneseq
  %v861 = vshrl.u32 %v860, 7
  %v862 = vsub.s32 %v859, %v861
  %v863 = vrot.slane %v849, %v862
  %v864 = vcombine.low %v799, %v815
  %v865 = vcombine.high %v799, %v815
  %v867 = vunpack.c.l.s4 1934713408
  %v868 = vunpack.c.0.s8 %v867
  %v869 = vlaneseq
  %v870 = vshrl.u32 %v869, 7
  %v871 = vsub.s32 %v868, %v870
  %v872 = vrot.slane %v864, %v871
  %v874 = vunpack.c.l.s4 1934713408
  %v875 = vunpack.c.0.s8 %v874
  %v876 = vlaneseq
  %v877 = vshrl.u32 %v876, 7
  %v878 = vsub.s32 %v875, %v877
  %v879 = vrot.slane %v865, %v878
  %v880 = vcombine.low %v824, %v840
  %v881 = vcombine.high %v824, %v840
  %v883 = vunpack.c.l.s4 1934713408
  %v884 = vunpack.c.0.s8 %v883
  %v885 = vlaneseq
  %v886 = vshrl.u32 %v885, 7
  %v887 = vsub.s32 %v884, %v886
  %v888 = vrot.slane %v880, %v887
  %v890 = vunpack.c.l.s4 1934713408
  %v891 = vunpack.c.0.s8 %v890
  %v892 = vlaneseq
  %v893 = vshrl.u32 %v892, 7
  %v894 = vsub.s32 %v891, %v893
  %v895 = vrot.slane %v881, %v894
  %v896 = vcombine.low %v831, %v847
  %v897 = vcombine.high %v831, %v847
  %v899 = vunpack.c.l.s4 1934713408
  %v900 = vunpack.c.0.s8 %v899
  %v901 = vlaneseq
  %v902 = vshrl.u32 %v901, 7
  %v903 = vsub.s32 %v900, %v902
  %v904 = vrot.slane %v896, %v903
  %v906 = vunpack.c.l.s4 1934713408
  %v907 = vunpack.c.0.s8 %v906
  %v908 = vlaneseq
  %v909 = vshrl.u32 %v908, 7
  %v910 = vsub.s32 %v907, %v909
  %v911 = vrot.slane %v897, %v910
  %v912 = vcombine.low %v856, %v888
  %v913 = vcombine.high %v856, %v888
  %v914 = vcombine.low %v863, %v895
  %v915 = vcombine.high %v863, %v895
  %v916 = vcombine.low %v872, %v904
  %v917 = vcombine.high %v872, %v904
  %v918 = vcombine.low %v879, %v911
  %v919 = vcombine.high %v879, %v911
  %v920 = vcombine.low %v12, %v97
  %v921 = vcombine.high %v12, %v97
  %v923 = vunpack.c.l.s4 1983009808
  %v924 = vunpack.c.0.s8 %v923
  %v925 = vlaneseq
  %v926 = vshrl.u32 %v925, 7
  %v927 = vsub.s32 %v924, %v926
  %v928 = vrot.slane %v920, %v927
  %v930 = vunpack.c.l.s4 1983009808
  %v931 = vunpack.c.0.s8 %v930
  %v932 = vlaneseq
  %v933 = vshrl.u32 %v932, 7
  %v934 = vsub.s32 %v931, %v933
  %v935 = vrot.slane %v921, %v934
  %v936 = vcombine.low %v49, %v145
  %v937 = vcombine.high %v49, %v145
  %v939 = vunpack.c.l.s4 1983009808
  %v940 = vunpack.c.0.s8 %v939
  %v941 = vlaneseq
  %v942 = vshrl.u32 %v941, 7
  %v943 = vsub.s32 %v940, %v942
  %v944 = vrot.slane %v936, %v943
  %v946 = vunpack.c.l.s4 1983009808
  %v947 = vunpack.c.0.s8 %v946
  %v948 = vlaneseq
  %v949 = vshrl.u32 %v948, 7
  %v950 = vsub.s32 %v947, %v949
  %v951 = vrot.slane %v937, %v950
  %v952 = vcombine.low %v193, %v289
  %v953 = vcombine.high %v193, %v289
  %v955 = vunpack.c.l.s4 1983009808
  %v956 = vunpack.c.0.s8 %v955
  %v957 = vlaneseq
  %v958 = vshrl.u32 %v957, 7
  %v959 = vsub.s32 %v956, %v958
  %v960 = vrot.slane %v952, %v959
  %v962 = vunpack.c.l.s4 1983009808
  %v963 = vunpack.c.0.s8 %v962
  %v964 = vlaneseq
  %v965 = vshrl.u32 %v964, 7
  %v966 = vsub.s32 %v963, %v965
  %v967 = vrot.slane %v953, %v966
  %v968 = vcombine.low %v241, %v337
  %v969 = vcombine.high %v241, %v337
  %v971 = vunpack.c.l.s4 1983009808
  %v972 = vunpack.c.0.s8 %v971
  %v973 = vlaneseq
  %v974 = vshrl.u32 %v973, 7
  %v975 = vsub.s32 %v972, %v974
  %v976 = vrot.slane %v968, %v975
  %v978 = vunpack.c.l.s4 1983009808
  %v979 = vunpack.c.0.s8 %v978
  %v980 = vlaneseq
  %v981 = vshrl.u32 %v980, 7
  %v982 = vsub.s32 %v979, %v981
  %v983 = vrot.slane %v969, %v982
  %v984 = vcombine.low %v928, %v944
  %v985 = vcombine.high %v928, %v944
  %v987 = vunpack.c.l.s4 1934713408
  %v988 = vunpack.c.0.s8 %v987
  %v989 = vlaneseq
  %v990 = vshrl.u32 %v989, 7
  %v991 = vsub.s32 %v988, %v990
  %v992 = vrot.slane %v984, %v991
  %v994 = vunpack.c.l.s4 1934713408
  %v995 = vunpack.c.0.s8 %v994
  %v996 = vlaneseq
  %v997 = vshrl.u32 %v996, 7
  %v998 = vsub.s32 %v995, %v997
  %v999 = vrot.slane %v985, %v998
  %v1000 = vcombine.low %v935, %v951
  %v1001 = vcombine.high %v935, %v951
  %v1003 = vunpack.c.l.s4 1934713408
  %v1004 = vunpack.c.0.s8 %v1003
  %v1005 = vlaneseq
  %v1006 = vshrl.u32 %v1005, 7
  %v1007 = vsub.s32 %v1004, %v1006
  %v1008 = vrot.slane %v1000, %v1007
  %v1010 = vunpack.c.l.s4 1934713408
  %v1011 = vunpack.c.0.s8 %v1010
  %v1012 = vlaneseq
  %v1013 = vshrl.u32 %v1012, 7
  %v1014 = vsub.s32 %v1011, %v1013
  %v1015 = vrot.slane %v1001, %v1014
  %v1016 = vcombine.low %v960, %v976
  %v1017 = vcombine.high %v960, %v976
  %v1019 = vunpack.c.l.s4 1934713408
  %v1020 = vunpack.c.0.s8 %v1019
  %v1021 = vlaneseq
  %v1022 = vshrl.u32 %v1021, 7
  %v1023 = vsub.s32 %v1020, %v1022
  %v1024 = vrot.slane %v1016, %v1023
  %v1026 = vunpack.c.l.s4 1934713408
  %v1027 = vunpack.c.0.s8 %v1026
  %v1028 = vlaneseq
  %v1029 = vshrl.u32 %v1028, 7
  %v1030 = vsub.s32 %v1027, %v1029
  %v1031 = vrot.slane %v1017, %v1030
  %v1032 = vcombine.low %v967, %v983
  %v1033 = vcombine.high %v967, %v983
  %v1035 = vunpack.c.l.s4 1934713408
  %v1036 = vunpack.c.0.s8 %v1035
  %v1037 = vlaneseq
  %v1038 = vshrl.u32 %v1037, 7
  %v1039 = vsub.s32 %v1036, %v1038
  %v1040 = vrot.slane %v1032, %v1039
  %v1042 = vunpack.c.l.s4 1934713408
  %v1043 = vunpack.c.0.s8 %v1042
  %v1044 = vlaneseq
  %v1045 = vshrl.u32 %v1044, 7
  %v1046 = vsub.s32 %v1043, %v1045
  %v1047 = vrot.slane %v1033, %v1046
  %v1048 = vcombine.low %v992, %v1024
  %v1049 = vcombine.high %v992, %v1024
  %v1050 = vcombine.low %v999, %v1031
  %v1051 = vcombine.high %v999, %v1031
  %v1052 = vcombine.low %v1008, %v1040
  %v1053 = vcombine.high %v1008, %v1040
  %v1054 = vcombine.low %v1015, %v1047
  %v1055 = vcombine.high %v1015, %v1047
  %v1056 = vcombine.low %v13, %v99
  %v1057 = vcombine.high %v13, %v99
  %v1059 = vunpack.c.l.s4 1983009808
  %v1060 = vunpack.c.0.s8 %v1059
  %v1061 = vlaneseq
  %v1062 = vshrl.u32 %v1061, 7
  %v1063 = vsub.s32 %v1060, %v1062
  %v1064 = vrot.slane %v1056, %v1063
  %v1066 = vunpack.c.l.s4 1983009808
  %v1067 = vunpack.c.0.s8 %v1066
  %v1068 = vlaneseq
  %v1069 = vshrl.u32 %v1068, 7
  %v1070 = vsub.s32 %v1067, %v1069
  %v1071 = vrot.slane %v1057, %v1070
  %v1072 = vcombine.low %v51, %v147
  %v1073 = vcombine.high %v51, %v147
  %v1075 = vunpack.c.l.s4 1983009808
  %v1076 = vunpack.c.0.s8 %v1075
  %v1077 = vlaneseq
  %v1078 = vshrl.u32 %v1077, 7
  %v1079 = vsub.s32 %v1076, %v1078
  %v1080 = vrot.slane %v1072, %v1079
  %v1082 = vunpack.c.l.s4 1983009808
  %v1083 = vunpack.c.0.s8 %v1082
  %v1084 = vlaneseq
  %v1085 = vshrl.u32 %v1084, 7
  %v1086 = vsub.s32 %v1083, %v1085
  %v1087 = vrot.slane %v1073, %v1086
  %v1088 = vcombine.low %v195, %v291
  %v1089 = vcombine.high %v195, %v291
  %v1091 = vunpack.c.l.s4 1983009808
  %v1092 = vunpack.c.0.s8 %v1091
  %v1093 = vlaneseq
  %v1094 = vshrl.u32 %v1093, 7
  %v1095 = vsub.s32 %v1092, %v1094
  %v1096 = vrot.slane %v1088, %v1095
  %v1098 = vunpack.c.l.s4 1983009808
  %v1099 = vunpack.c.0.s8 %v1098
  %v1100 = vlaneseq
  %v1101 = vshrl.u32 %v1100, 7
  %v1102 = vsub.s32 %v1099, %v1101
  %v1103 = vrot.slane %v1089, %v1102
  %v1104 = vcombine.low %v243, %v339
  %v1105 = vcombine.high %v243, %v339
  %v1107 = vunpack.c.l.s4 1983009808
  %v1108 = vunpack.c.0.s8 %v1107
  %v1109 = vlaneseq
  %v1110 = vshrl.u32 %v1109, 7
  %v1111 = vsub.s32 %v1108, %v1110
  %v1112 = vrot.slane %v1104, %v1111
  %v1114 = vunpack.c.l.s4 1983009808
  %v1115 = vunpack.c.0.s8 %v1114
  %v1116 = vlaneseq
  %v1117 = vshrl.u32 %v1116, 7
  %v1118 = vsub.s32 %v1115, %v1117
  %v1119 = vrot.slane %v1105, %v1118
  %v1120 = vcombine.low %v1064, %v1080
  %v1121 = vcombine.high %v1064, %v1080
  %v1123 = vunpack.c.l.s4 1934713408
  %v1124 = vunpack.c.0.s8 %v1123
  %v1125 = vlaneseq
  %v1126 = vshrl.u32 %v1125, 7
  %v1127 = vsub.s32 %v1124, %v1126
  %v1128 = vrot.slane %v1120, %v1127
  %v1130 = vunpack.c.l.s4 1934713408
  %v1131 = vunpack.c.0.s8 %v1130
  %v1132 = vlaneseq
  %v1133 = vshrl.u32 %v1132, 7
  %v1134 = vsub.s32 %v1131, %v1133
  %v1135 = vrot.slane %v1121, %v1134
  %v1136 = vcombine.low %v1071, %v1087
  %v1137 = vcombine.high %v1071, %v1087
  %v1139 = vunpack.c.l.s4 1934713408
  %v1140 = vunpack.c.0.s8 %v1139
  %v1141 = vlaneseq
  %v1142 = vshrl.u32 %v1141, 7
  %v1143 = vsub.s32 %v1140, %v1142
  %v1144 = vrot.slane %v1136, %v1143
  %v1146 = vunpack.c.l.s4 1934713408
  %v1147 = vunpack.c.0.s8 %v1146
  %v1148 = vlaneseq
  %v1149 = vshrl.u32 %v1148, 7
  %v1150 = vsub.s32 %v1147, %v1149
  %v1151 = vrot.slane %v1137, %v1150
  %v1152 = vcombine.low %v1096, %v1112
  %v1153 = vcombine.high %v1096, %v1112
  %v1155 = vunpack.c.l.s4 1934713408
  %v1156 = vunpack.c.0.s8 %v1155
  %v1157 = vlaneseq
  %v1158 = vshrl.u32 %v1157, 7
  %v1159 = vsub.s32 %v1156, %v1158
  %v1160 = vrot.slane %v1152, %v1159
  %v1162 = vunpack.c.l.s4 1934713408
  %v1163 = vunpack.c.0.s8 %v1162
  %v1164 = vlaneseq
  %v1165 = vshrl.u32 %v1164, 7
  %v1166 = vsub.s32 %v1163, %v1165
  %v1167 = vrot.slane %v1153, %v1166
  %v1168 = vcombine.low %v1103, %v1119
  %v1169 = vcombine.high %v1103, %v1119
  %v1171 = vunpack.c.l.s4 1934713408
  %v1172 = vunpack.c.0.s8 %v1171
  %v1173 = vlaneseq
  %v1174 = vshrl.u32 %v1173, 7
  %v1175 = vsub.s32 %v1172, %v1174
  %v1176 = vrot.slane %v1168, %v1175
  %v1178 = vunpack.c.l.s4 1934713408
  %v1179 = vunpack.c.0.s8 %v1178
  %v1180 = vlaneseq
  %v1181 = vshrl.u32 %v1180, 7
  %v1182 = vsub.s32 %v1179, %v1181
  %v1183 = vrot.slane %v1169, %v1182
  %v1184 = vcombine.low %v1128, %v1160
  %v1185 = vcombine.high %v1128, %v1160
  %v1186 = vcombine.low %v1135, %v1167
  %v1187 = vcombine.high %v1135, %v1167
  %v1188 = vcombine.low %v1144, %v1176
  %v1189 = vcombine.high %v1144, %v1176
  %v1190 = vcombine.low %v1151, %v1183
  %v1191 = vcombine.high %v1151, %v1183
  %v1192 = vcombine.low %v14, %v101
  %v1193 = vcombine.high %v14, %v101
  %v1195 = vunpack.c.l.s4 1983009808
  %v1196 = vunpack.c.0.s8 %v1195
  %v1197 = vlaneseq
  %v1198 = vshrl.u32 %v1197, 7
  %v1199 = vsub.s32 %v1196, %v1198
  %v1200 = vrot.slane %v1192, %v1199
  %v1202 = vunpack.c.l.s4 1983009808
  %v1203 = vunpack.c.0.s8 %v1202
  %v1204 = vlaneseq
  %v1205 = vshrl.u32 %v1204, 7
  %v1206 = vsub.s32 %v1203, %v1205
  %v1207 = vrot.slane %v1193, %v1206
  %v1208 = vcombine.low %v53, %v149
  %v1209 = vcombine.high %v53, %v149
  %v1211 = vunpack.c.l.s4 1983009808
  %v1212 = vunpack.c.0.s8 %v1211
  %v1213 = vlaneseq
  %v1214 = vshrl.u32 %v1213, 7
  %v1215 = vsub.s32 %v1212, %v1214
  %v1216 = vrot.slane %v1208, %v1215
  %v1218 = vunpack.c.l.s4 1983009808
  %v1219 = vunpack.c.0.s8 %v1218
  %v1220 = vlaneseq
  %v1221 = vshrl.u32 %v1220, 7
  %v1222 = vsub.s32 %v1219, %v1221
  %v1223 = vrot.slane %v1209, %v1222
  %v1224 = vcombine.low %v197, %v293
  %v1225 = vcombine.high %v197, %v293
  %v1227 = vunpack.c.l.s4 1983009808
  %v1228 = vunpack.c.0.s8 %v1227
  %v1229 = vlaneseq
  %v1230 = vshrl.u32 %v1229, 7
  %v1231 = vsub.s32 %v1228, %v1230
  %v1232 = vrot.slane %v1224, %v1231
  %v1234 = vunpack.c.l.s4 1983009808
  %v1235 = vunpack.c.0.s8 %v1234
  %v1236 = vlaneseq
  %v1237 = vshrl.u32 %v1236, 7
  %v1238 = vsub.s32 %v1235, %v1237
  %v1239 = vrot.slane %v1225, %v1238
  %v1240 = vcombine.low %v245, %v341
  %v1241 = vcombine.high %v245, %v341
  %v1243 = vunpack.c.l.s4 1983009808
  %v1244 = vunpack.c.0.s8 %v1243
  %v1245 = vlaneseq
  %v1246 = vshrl.u32 %v1245, 7
  %v1247 = vsub.s32 %v1244, %v1246
  %v1248 = vrot.slane %v1240, %v1247
  %v1250 = vunpack.c.l.s4 1983009808
  %v1251 = vunpack.c.0.s8 %v1250
  %v1252 = vlaneseq
  %v1253 = vshrl.u32 %v1252, 7
  %v1254 = vsub.s32 %v1251, %v1253
  %v1255 = vrot.slane %v1241, %v1254
  %v1256 = vcombine.low %v1200, %v1216
  %v1257 = vcombine.high %v1200, %v1216
  %v1259 = vunpack.c.l.s4 1934713408
  %v1260 = vunpack.c.0.s8 %v1259
  %v1261 = vlaneseq
  %v1262 = vshrl.u32 %v1261, 7
  %v1263 = vsub.s32 %v1260, %v1262
  %v1264 = vrot.slane %v1256, %v1263
  %v1266 = vunpack.c.l.s4 1934713408
  %v1267 = vunpack.c.0.s8 %v1266
  %v1268 = vlaneseq
  %v1269 = vshrl.u32 %v1268, 7
  %v1270 = vsub.s32 %v1267, %v1269
  %v1271 = vrot.slane %v1257, %v1270
  %v1272 = vcombine.low %v1207, %v1223
  %v1273 = vcombine.high %v1207, %v1223
  %v1275 = vunpack.c.l.s4 1934713408
  %v1276 = vunpack.c.0.s8 %v1275
  %v1277 = vlaneseq
  %v1278 = vshrl.u32 %v1277, 7
  %v1279 = vsub.s32 %v1276, %v1278
  %v1280 = vrot.slane %v1272, %v1279
  %v1282 = vunpack.c.l.s4 1934713408
  %v1283 = vunpack.c.0.s8 %v1282
  %v1284 = vlaneseq
  %v1285 = vshrl.u32 %v1284, 7
  %v1286 = vsub.s32 %v1283, %v1285
  %v1287 = vrot.slane %v1273, %v1286
  %v1288 = vcombine.low %v1232, %v1248
  %v1289 = vcombine.high %v1232, %v1248
  %v1291 = vunpack.c.l.s4 1934713408
  %v1292 = vunpack.c.0.s8 %v1291
  %v1293 = vlaneseq
  %v1294 = vshrl.u32 %v1293, 7
  %v1295 = vsub.s32 %v1292, %v1294
  %v1296 = vrot.slane %v1288, %v1295
  %v1298 = vunpack.c.l.s4 1934713408
  %v1299 = vunpack.c.0.s8 %v1298
  %v1300 = vlaneseq
  %v1301 = vshrl.u32 %v1300, 7
  %v1302 = vsub.s32 %v1299, %v1301
  %v1303 = vrot.slane %v1289, %v1302
  %v1304 = vcombine.low %v1239, %v1255
  %v1305 = vcombine.high %v1239, %v1255
  %v1307 = vunpack.c.l.s4 1934713408
  %v1308 = vunpack.c.0.s8 %v1307
  %v1309 = vlaneseq
  %v1310 = vshrl.u32 %v1309, 7
  %v1311 = vsub.s32 %v1308, %v1310
  %v1312 = vrot.slane %v1304, %v1311
  %v1314 = vunpack.c.l.s4 1934713408
  %v1315 = vunpack.c.0.s8 %v1314
  %v1316 = vlaneseq
  %v1317 = vshrl.u32 %v1316, 7
  %v1318 = vsub.s32 %v1315, %v1317
  %v1319 = vrot.slane %v1305, %v1318
  %v1320 = vcombine.low %v1264, %v1296
  %v1321 = vcombine.high %v1264, %v1296
  %v1322 = vcombine.low %v1271, %v1303
  %v1323 = vcombine.high %v1271, %v1303
  %v1324 = vcombine.low %v1280, %v1312
  %v1325 = vcombine.high %v1280, %v1312
  %v1326 = vcombine.low %v1287, %v1319
  %v1327 = vcombine.high %v1287, %v1319
  %v1328 = vcombine.low %v15, %v103
  %v1329 = vcombine.high %v15, %v103
  %v1331 = vunpack.c.l.s4 1983009808
  %v1332 = vunpack.c.0.s8 %v1331
  %v1333 = vlaneseq
  %v1334 = vshrl.u32 %v1333, 7
  %v1335 = vsub.s32 %v1332, %v1334
  %v1336 = vrot.slane %v1328, %v1335
  %v1338 = vunpack.c.l.s4 1983009808
  %v1339 = vunpack.c.0.s8 %v1338
  %v1340 = vlaneseq
  %v1341 = vshrl.u32 %v1340, 7
  %v1342 = vsub.s32 %v1339, %v1341
  %v1343 = vrot.slane %v1329, %v1342
  %v1344 = vcombine.low %v55, %v151
  %v1345 = vcombine.high %v55, %v151
  %v1347 = vunpack.c.l.s4 1983009808
  %v1348 = vunpack.c.0.s8 %v1347
  %v1349 = vlaneseq
  %v1350 = vshrl.u32 %v1349, 7
  %v1351 = vsub.s32 %v1348, %v1350
  %v1352 = vrot.slane %v1344, %v1351
  %v1354 = vunpack.c.l.s4 1983009808
  %v1355 = vunpack.c.0.s8 %v1354
  %v1356 = vlaneseq
  %v1357 = vshrl.u32 %v1356, 7
  %v1358 = vsub.s32 %v1355, %v1357
  %v1359 = vrot.slane %v1345, %v1358
  %v1360 = vcombine.low %v199, %v295
  %v1361 = vcombine.high %v199, %v295
  %v1363 = vunpack.c.l.s4 1983009808
  %v1364 = vunpack.c.0.s8 %v1363
  %v1365 = vlaneseq
  %v1366 = vshrl.u32 %v1365, 7
  %v1367 = vsub.s32 %v1364, %v1366
  %v1368 = vrot.slane %v1360, %v1367
  %v1370 = vunpack.c.l.s4 1983009808
  %v1371 = vunpack.c.0.s8 %v1370
  %v1372 = vlaneseq
  %v1373 = vshrl.u32 %v1372, 7
  %v1374 = vsub.s32 %v1371, %v1373
  %v1375 = vrot.slane %v1361, %v1374
  %v1376 = vcombine.low %v247, %v343
  %v1377 = vcombine.high %v247, %v343
  %v1379 = vunpack.c.l.s4 1983009808
  %v1380 = vunpack.c.0.s8 %v1379
  %v1381 = vlaneseq
  %v1382 = vshrl.u32 %v1381, 7
  %v1383 = vsub.s32 %v1380, %v1382
  %v1384 = vrot.slane %v1376, %v1383
  %v1386 = vunpack.c.l.s4 1983009808
  %v1387 = vunpack.c.0.s8 %v1386
  %v1388 = vlaneseq
  %v1389 = vshrl.u32 %v1388, 7
  %v1390 = vsub.s32 %v1387, %v1389
  %v1391 = vrot.slane %v1377, %v1390
  %v1392 = vcombine.low %v1336, %v1352
  %v1393 = vcombine.high %v1336, %v1352
  %v1395 = vunpack.c.l.s4 1934713408
  %v1396 = vunpack.c.0.s8 %v1395
  %v1397 = vlaneseq
  %v1398 = vshrl.u32 %v1397, 7
  %v1399 = vsub.s32 %v1396, %v1398
  %v1400 = vrot.slane %v1392, %v1399
  %v1402 = vunpack.c.l.s4 1934713408
  %v1403 = vunpack.c.0.s8 %v1402
  %v1404 = vlaneseq
  %v1405 = vshrl.u32 %v1404, 7
  %v1406 = vsub.s32 %v1403, %v1405
  %v1407 = vrot.slane %v1393, %v1406
  %v1408 = vcombine.low %v1343, %v1359
  %v1409 = vcombine.high %v1343, %v1359
  %v1411 = vunpack.c.l.s4 1934713408
  %v1412 = vunpack.c.0.s8 %v1411
  %v1413 = vlaneseq
  %v1414 = vshrl.u32 %v1413, 7
  %v1415 = vsub.s32 %v1412, %v1414
  %v1416 = vrot.slane %v1408, %v1415
  %v1418 = vunpack.c.l.s4 1934713408
  %v1419 = vunpack.c.0.s8 %v1418
  %v1420 = vlaneseq
  %v1421 = vshrl.u32 %v1420, 7
  %v1422 = vsub.s32 %v1419, %v1421
  %v1423 = vrot.slane %v1409, %v1422
  %v1424 = vcombine.low %v1368, %v1384
  %v1425 = vcombine.high %v1368, %v1384
  %v1427 = vunpack.c.l.s4 1934713408
  %v1428 = vunpack.c.0.s8 %v1427
  %v1429 = vlaneseq
  %v1430 = vshrl.u32 %v1429, 7
  %v1431 = vsub.s32 %v1428, %v1430
  %v1432 = vrot.slane %v1424, %v1431
  %v1434 = vunpack.c.l.s4 1934713408
  %v1435 = vunpack.c.0.s8 %v1434
  %v1436 = vlaneseq
  %v1437 = vshrl.u32 %v1436, 7
  %v1438 = vsub.s32 %v1435, %v1437
  %v1439 = vrot.slane %v1425, %v1438
  %v1440 = vcombine.low %v1375, %v1391
  %v1441 = vcombine.high %v1375, %v1391
  %v1443 = vunpack.c.l.s4 1934713408
  %v1444 = vunpack.c.0.s8 %v1443
  %v1445 = vlaneseq
  %v1446 = vshrl.u32 %v1445, 7
  %v1447 = vsub.s32 %v1444, %v1446
  %v1448 = vrot.slane %v1440, %v1447
  %v1450 = vunpack.c.l.s4 1934713408
  %v1451 = vunpack.c.0.s8 %v1450
  %v1452 = vlaneseq
  %v1453 = vshrl.u32 %v1452, 7
  %v1454 = vsub.s32 %v1451, %v1453
  %v1455 = vrot.slane %v1441, %v1454
  %v1456 = vcombine.low %v1400, %v1432
  %v1457 = vcombine.high %v1400, %v1432
  %v1458 = vcombine.low %v1407, %v1439
  %v1459 = vcombine.high %v1407, %v1439
  %v1460 = vcombine.low %v1416, %v1448
  %v1461 = vcombine.high %v1416, %v1448
  %v1462 = vcombine.low %v1423, %v1455
  %v1463 = vcombine.high %v1423, %v1455
  %v1464 = vcombine.low %v16, %v105
  %v1465 = vcombine.high %v16, %v105
  %v1467 = vunpack.c.l.s4 1983009808
  %v1468 = vunpack.c.0.s8 %v1467
  %v1469 = vlaneseq
  %v1470 = vshrl.u32 %v1469, 7
  %v1471 = vsub.s32 %v1468, %v1470
  %v1472 = vrot.slane %v1464, %v1471
  %v1474 = vunpack.c.l.s4 1983009808
  %v1475 = vunpack.c.0.s8 %v1474
  %v1476 = vlaneseq
  %v1477 = vshrl.u32 %v1476, 7
  %v1478 = vsub.s32 %v1475, %v1477
  %v1479 = vrot.slane %v1465, %v1478
  %v1480 = vcombine.low %v57, %v153
  %v1481 = vcombine.high %v57, %v153
  %v1483 = vunpack.c.l.s4 1983009808
  %v1484 = vunpack.c.0.s8 %v1483
  %v1485 = vlaneseq
  %v1486 = vshrl.u32 %v1485, 7
  %v1487 = vsub.s32 %v1484, %v1486
  %v1488 = vrot.slane %v1480, %v1487
  %v1490 = vunpack.c.l.s4 1983009808
  %v1491 = vunpack.c.0.s8 %v1490
  %v1492 = vlaneseq
  %v1493 = vshrl.u32 %v1492, 7
  %v1494 = vsub.s32 %v1491, %v1493
  %v1495 = vrot.slane %v1481, %v1494
  %v1496 = vcombine.low %v201, %v297
  %v1497 = vcombine.high %v201, %v297
  %v1499 = vunpack.c.l.s4 1983009808
  %v1500 = vunpack.c.0.s8 %v1499
  %v1501 = vlaneseq
  %v1502 = vshrl.u32 %v1501, 7
  %v1503 = vsub.s32 %v1500, %v1502
  %v1504 = vrot.slane %v1496, %v1503
  %v1506 = vunpack.c.l.s4 1983009808
  %v1507 = vunpack.c.0.s8 %v1506
  %v1508 = vlaneseq
  %v1509 = vshrl.u32 %v1508, 7
  %v1510 = vsub.s32 %v1507, %v1509
  %v1511 = vrot.slane %v1497, %v1510
  %v1512 = vcombine.low %v249, %v345
  %v1513 = vcombine.high %v249, %v345
  %v1515 = vunpack.c.l.s4 1983009808
  %v1516 = vunpack.c.0.s8 %v1515
  %v1517 = vlaneseq
  %v1518 = vshrl.u32 %v1517, 7
  %v1519 = vsub.s32 %v1516, %v1518
  %v1520 = vrot.slane %v1512, %v1519
  %v1522 = vunpack.c.l.s4 1983009808
  %v1523 = vunpack.c.0.s8 %v1522
  %v1524 = vlaneseq
  %v1525 = vshrl.u32 %v1524, 7
  %v1526 = vsub.s32 %v1523, %v1525
  %v1527 = vrot.slane %v1513, %v1526
  %v1528 = vcombine.low %v1472, %v1488
  %v1529 = vcombine.high %v1472, %v1488
  %v1531 = vunpack.c.l.s4 1934713408
  %v1532 = vunpack.c.0.s8 %v1531
  %v1533 = vlaneseq
  %v1534 = vshrl.u32 %v1533, 7
  %v1535 = vsub.s32 %v1532, %v1534
  %v1536 = vrot.slane %v1528, %v1535
  %v1538 = vunpack.c.l.s4 1934713408
  %v1539 = vunpack.c.0.s8 %v1538
  %v1540 = vlaneseq
  %v1541 = vshrl.u32 %v1540, 7
  %v1542 = vsub.s32 %v1539, %v1541
  %v1543 = vrot.slane %v1529, %v1542
  %v1544 = vcombine.low %v1479, %v1495
  %v1545 = vcombine.high %v1479, %v1495
  %v1547 = vunpack.c.l.s4 1934713408
  %v1548 = vunpack.c.0.s8 %v1547
  %v1549 = vlaneseq
  %v1550 = vshrl.u32 %v1549, 7
  %v1551 = vsub.s32 %v1548, %v1550
  %v1552 = vrot.slane %v1544, %v1551
  %v1554 = vunpack.c.l.s4 1934713408
  %v1555 = vunpack.c.0.s8 %v1554
  %v1556 = vlaneseq
  %v1557 = vshrl.u32 %v1556, 7
  %v1558 = vsub.s32 %v1555, %v1557
  %v1559 = vrot.slane %v1545, %v1558
  %v1560 = vcombine.low %v1504, %v1520
  %v1561 = vcombine.high %v1504, %v1520
  %v1563 = vunpack.c.l.s4 1934713408
  %v1564 = vunpack.c.0.s8 %v1563
  %v1565 = vlaneseq
  %v1566 = vshrl.u32 %v1565, 7
  %v1567 = vsub.s32 %v1564, %v1566
  %v1568 = vrot.slane %v1560, %v1567
  %v1570 = vunpack.c.l.s4 1934713408
  %v1571 = vunpack.c.0.s8 %v1570
  %v1572 = vlaneseq
  %v1573 = vshrl.u32 %v1572, 7
  %v1574 = vsub.s32 %v1571, %v1573
  %v1575 = vrot.slane %v1561, %v1574
  %v1576 = vcombine.low %v1511, %v1527
  %v1577 = vcombine.high %v1511, %v1527
  %v1579 = vunpack.c.l.s4 1934713408
  %v1580 = vunpack.c.0.s8 %v1579
  %v1581 = vlaneseq
  %v1582 = vshrl.u32 %v1581, 7
  %v1583 = vsub.s32 %v1580, %v1582
  %v1584 = vrot.slane %v1576, %v1583
  %v1586 = vunpack.c.l.s4 1934713408
  %v1587 = vunpack.c.0.s8 %v1586
  %v1588 = vlaneseq
  %v1589 = vshrl.u32 %v1588, 7
  %v1590 = vsub.s32 %v1587, %v1589
  %v1591 = vrot.slane %v1577, %v1590
  %v1592 = vcombine.low %v1536, %v1568
  %v1593 = vcombine.high %v1536, %v1568
  %v1594 = vcombine.low %v1543, %v1575
  %v1595 = vcombine.high %v1543, %v1575
  %v1596 = vcombine.low %v1552, %v1584
  %v1597 = vcombine.high %v1552, %v1584
  %v1598 = vcombine.low %v1559, %v1591
  %v1599 = vcombine.high %v1559, %v1591
  %v1600 = vcombine.low %v17, %v107
  %v1601 = vcombine.high %v17, %v107
  %v1603 = vunpack.c.l.s4 1983009808
  %v1604 = vunpack.c.0.s8 %v1603
  %v1605 = vlaneseq
  %v1606 = vshrl.u32 %v1605, 7
  %v1607 = vsub.s32 %v1604, %v1606
  %v1608 = vrot.slane %v1600, %v1607
  %v1610 = vunpack.c.l.s4 1983009808
  %v1611 = vunpack.c.0.s8 %v1610
  %v1612 = vlaneseq
  %v1613 = vshrl.u32 %v1612, 7
  %v1614 = vsub.s32 %v1611, %v1613
  %v1615 = vrot.slane %v1601, %v1614
  %v1616 = vcombine.low %v59, %v155
  %v1617 = vcombine.high %v59, %v155
  %v1619 = vunpack.c.l.s4 1983009808
  %v1620 = vunpack.c.0.s8 %v1619
  %v1621 = vlaneseq
  %v1622 = vshrl.u32 %v1621, 7
  %v1623 = vsub.s32 %v1620, %v1622
  %v1624 = vrot.slane %v1616, %v1623
  %v1626 = vunpack.c.l.s4 1983009808
  %v1627 = vunpack.c.0.s8 %v1626
  %v1628 = vlaneseq
  %v1629 = vshrl.u32 %v1628, 7
  %v1630 = vsub.s32 %v1627, %v1629
  %v1631 = vrot.slane %v1617, %v1630
  %v1632 = vcombine.low %v203, %v299
  %v1633 = vcombine.high %v203, %v299
  %v1635 = vunpack.c.l.s4 1983009808
  %v1636 = vunpack.c.0.s8 %v1635
  %v1637 = vlaneseq
  %v1638 = vshrl.u32 %v1637, 7
  %v1639 = vsub.s32 %v1636, %v1638
  %v1640 = vrot.slane %v1632, %v1639
  %v1642 = vunpack.c.l.s4 1983009808
  %v1643 = vunpack.c.0.s8 %v1642
  %v1644 = vlaneseq
  %v1645 = vshrl.u32 %v1644, 7
  %v1646 = vsub.s32 %v1643, %v1645
  %v1647 = vrot.slane %v1633, %v1646
  %v1648 = vcombine.low %v251, %v347
  %v1649 = vcombine.high %v251, %v347
  %v1651 = vunpack.c.l.s4 1983009808
  %v1652 = vunpack.c.0.s8 %v1651
  %v1653 = vlaneseq
  %v1654 = vshrl.u32 %v1653, 7
  %v1655 = vsub.s32 %v1652, %v1654
  %v1656 = vrot.slane %v1648, %v1655
  %v1658 = vunpack.c.l.s4 1983009808
  %v1659 = vunpack.c.0.s8 %v1658
  %v1660 = vlaneseq
  %v1661 = vshrl.u32 %v1660, 7
  %v1662 = vsub.s32 %v1659, %v1661
  %v1663 = vrot.slane %v1649, %v1662
  %v1664 = vcombine.low %v1608, %v1624
  %v1665 = vcombine.high %v1608, %v1624
  %v1667 = vunpack.c.l.s4 1934713408
  %v1668 = vunpack.c.0.s8 %v1667
  %v1669 = vlaneseq
  %v1670 = vshrl.u32 %v1669, 7
  %v1671 = vsub.s32 %v1668, %v1670
  %v1672 = vrot.slane %v1664, %v1671
  %v1674 = vunpack.c.l.s4 1934713408
  %v1675 = vunpack.c.0.s8 %v1674
  %v1676 = vlaneseq
  %v1677 = vshrl.u32 %v1676, 7
  %v1678 = vsub.s32 %v1675, %v1677
  %v1679 = vrot.slane %v1665, %v1678
  %v1680 = vcombine.low %v1615, %v1631
  %v1681 = vcombine.high %v1615, %v1631
  %v1683 = vunpack.c.l.s4 1934713408
  %v1684 = vunpack.c.0.s8 %v1683
  %v1685 = vlaneseq
  %v1686 = vshrl.u32 %v1685, 7
  %v1687 = vsub.s32 %v1684, %v1686
  %v1688 = vrot.slane %v1680, %v1687
  %v1690 = vunpack.c.l.s4 1934713408
  %v1691 = vunpack.c.0.s8 %v1690
  %v1692 = vlaneseq
  %v1693 = vshrl.u32 %v1692, 7
  %v1694 = vsub.s32 %v1691, %v1693
  %v1695 = vrot.slane %v1681, %v1694
  %v1696 = vcombine.low %v1640, %v1656
  %v1697 = vcombine.high %v1640, %v1656
  %v1699 = vunpack.c.l.s4 1934713408
  %v1700 = vunpack.c.0.s8 %v1699
  %v1701 = vlaneseq
  %v1702 = vshrl.u32 %v1701, 7
  %v1703 = vsub.s32 %v1700, %v1702
  %v1704 = vrot.slane %v1696, %v1703
  %v1706 = vunpack.c.l.s4 1934713408
  %v1707 = vunpack.c.0.s8 %v1706
  %v1708 = vlaneseq
  %v1709 = vshrl.u32 %v1708, 7
  %v1710 = vsub.s32 %v1707, %v1709
  %v1711 = vrot.slane %v1697, %v1710
  %v1712 = vcombine.low %v1647, %v1663
  %v1713 = vcombine.high %v1647, %v1663
  %v1715 = vunpack.c.l.s4 1934713408
  %v1716 = vunpack.c.0.s8 %v1715
  %v1717 = vlaneseq
  %v1718 = vshrl.u32 %v1717, 7
  %v1719 = vsub.s32 %v1716, %v1718
  %v1720 = vrot.slane %v1712, %v1719
  %v1722 = vunpack.c.l.s4 1934713408
  %v1723 = vunpack.c.0.s8 %v1722
  %v1724 = vlaneseq
  %v1725 = vshrl.u32 %v1724, 7
  %v1726 = vsub.s32 %v1723, %v1725
  %v1727 = vrot.slane %v1713, %v1726
  %v1728 = vcombine.low %v1672, %v1704
  %v1729 = vcombine.high %v1672, %v1704
  %v1730 = vcombine.low %v1679, %v1711
  %v1731 = vcombine.high %v1679, %v1711
  %v1732 = vcombine.low %v1688, %v1720
  %v1733 = vcombine.high %v1688, %v1720
  %v1734 = vcombine.low %v1695, %v1727
  %v1735 = vcombine.high %v1695, %v1727
  %v1736 = vcombine.low %v18, %v109
  %v1737 = vcombine.high %v18, %v109
  %v1739 = vunpack.c.l.s4 1983009808
  %v1740 = vunpack.c.0.s8 %v1739
  %v1741 = vlaneseq
  %v1742 = vshrl.u32 %v1741, 7
  %v1743 = vsub.s32 %v1740, %v1742
  %v1744 = vrot.slane %v1736, %v1743
  %v1746 = vunpack.c.l.s4 1983009808
  %v1747 = vunpack.c.0.s8 %v1746
  %v1748 = vlaneseq
  %v1749 = vshrl.u32 %v1748, 7
  %v1750 = vsub.s32 %v1747, %v1749
  %v1751 = vrot.slane %v1737, %v1750
  %v1752 = vcombine.low %v61, %v157
  %v1753 = vcombine.high %v61, %v157
  %v1755 = vunpack.c.l.s4 1983009808
  %v1756 = vunpack.c.0.s8 %v1755
  %v1757 = vlaneseq
  %v1758 = vshrl.u32 %v1757, 7
  %v1759 = vsub.s32 %v1756, %v1758
  %v1760 = vrot.slane %v1752, %v1759
  %v1762 = vunpack.c.l.s4 1983009808
  %v1763 = vunpack.c.0.s8 %v1762
  %v1764 = vlaneseq
  %v1765 = vshrl.u32 %v1764, 7
  %v1766 = vsub.s32 %v1763, %v1765
  %v1767 = vrot.slane %v1753, %v1766
  %v1768 = vcombine.low %v205, %v301
  %v1769 = vcombine.high %v205, %v301
  %v1771 = vunpack.c.l.s4 1983009808
  %v1772 = vunpack.c.0.s8 %v1771
  %v1773 = vlaneseq
  %v1774 = vshrl.u32 %v1773, 7
  %v1775 = vsub.s32 %v1772, %v1774
  %v1776 = vrot.slane %v1768, %v1775
  %v1778 = vunpack.c.l.s4 1983009808
  %v1779 = vunpack.c.0.s8 %v1778
  %v1780 = vlaneseq
  %v1781 = vshrl.u32 %v1780, 7
  %v1782 = vsub.s32 %v1779, %v1781
  %v1783 = vrot.slane %v1769, %v1782
  %v1784 = vcombine.low %v253, %v349
  %v1785 = vcombine.high %v253, %v349
  %v1787 = vunpack.c.l.s4 1983009808
  %v1788 = vunpack.c.0.s8 %v1787
  %v1789 = vlaneseq
  %v1790 = vshrl.u32 %v1789, 7
  %v1791 = vsub.s32 %v1788, %v1790
  %v1792 = vrot.slane %v1784, %v1791
  %v1794 = vunpack.c.l.s4 1983009808
  %v1795 = vunpack.c.0.s8 %v1794
  %v1796 = vlaneseq
  %v1797 = vshrl.u32 %v1796, 7
  %v1798 = vsub.s32 %v1795, %v1797
  %v1799 = vrot.slane %v1785, %v1798
  %v1800 = vcombine.low %v1744, %v1760
  %v1801 = vcombine.high %v1744, %v1760
  %v1803 = vunpack.c.l.s4 1934713408
  %v1804 = vunpack.c.0.s8 %v1803
  %v1805 = vlaneseq
  %v1806 = vshrl.u32 %v1805, 7
  %v1807 = vsub.s32 %v1804, %v1806
  %v1808 = vrot.slane %v1800, %v1807
  %v1810 = vunpack.c.l.s4 1934713408
  %v1811 = vunpack.c.0.s8 %v1810
  %v1812 = vlaneseq
  %v1813 = vshrl.u32 %v1812, 7
  %v1814 = vsub.s32 %v1811, %v1813
  %v1815 = vrot.slane %v1801, %v1814
  %v1816 = vcombine.low %v1751, %v1767
  %v1817 = vcombine.high %v1751, %v1767
  %v1819 = vunpack.c.l.s4 1934713408
  %v1820 = vunpack.c.0.s8 %v1819
  %v1821 = vlaneseq
  %v1822 = vshrl.u32 %v1821, 7
  %v1823 = vsub.s32 %v1820, %v1822
  %v1824 = vrot.slane %v1816, %v1823
  %v1826 = vunpack.c.l.s4 1934713408
  %v1827 = vunpack.c.0.s8 %v1826
  %v1828 = vlaneseq
  %v1829 = vshrl.u32 %v1828, 7
  %v1830 = vsub.s32 %v1827, %v1829
  %v1831 = vrot.slane %v1817, %v1830
  %v1832 = vcombine.low %v1776, %v1792
  %v1833 = vcombine.high %v1776, %v1792
  %v1835 = vunpack.c.l.s4 1934713408
  %v1836 = vunpack.c.0.s8 %v1835
  %v1837 = vlaneseq
  %v1838 = vshrl.u32 %v1837, 7
  %v1839 = vsub.s32 %v1836, %v1838
  %v1840 = vrot.slane %v1832, %v1839
  %v1842 = vunpack.c.l.s4 1934713408
  %v1843 = vunpack.c.0.s8 %v1842
  %v1844 = vlaneseq
  %v1845 = vshrl.u32 %v1844, 7
  %v1846 = vsub.s32 %v1843, %v1845
  %v1847 = vrot.slane %v1833, %v1846
  %v1848 = vcombine.low %v1783, %v1799
  %v1849 = vcombine.high %v1783, %v1799
  %v1851 = vunpack.c.l.s4 1934713408
  %v1852 = vunpack.c.0.s8 %v1851
  %v1853 = vlaneseq
  %v1854 = vshrl.u32 %v1853, 7
  %v1855 = vsub.s32 %v1852, %v1854
  %v1856 = vrot.slane %v1848, %v1855
  %v1858 = vunpack.c.l.s4 1934713408
  %v1859 = vunpack.c.0.s8 %v1858
  %v1860 = vlaneseq
  %v1861 = vshrl.u32 %v1860, 7
  %v1862 = vsub.s32 %v1859, %v1861
  %v1863 = vrot.slane %v1849, %v1862
  %v1864 = vcombine.low %v1808, %v1840
  %v1865 = vcombine.high %v1808, %v1840
  %v1866 = vcombine.low %v1815, %v1847
  %v1867 = vcombine.high %v1815, %v1847
  %v1868 = vcombine.low %v1824, %v1856
  %v1869 = vcombine.high %v1824, %v1856
  %v1870 = vcombine.low %v1831, %v1863
  %v1871 = vcombine.high %v1831, %v1863
  %v1872 = vcombine.low %v19, %v111
  %v1873 = vcombine.high %v19, %v111
  %v1875 = vunpack.c.l.s4 1983009808
  %v1876 = vunpack.c.0.s8 %v1875
  %v1877 = vlaneseq
  %v1878 = vshrl.u32 %v1877, 7
  %v1879 = vsub.s32 %v1876, %v1878
  %v1880 = vrot.slane %v1872, %v1879
  %v1882 = vunpack.c.l.s4 1983009808
  %v1883 = vunpack.c.0.s8 %v1882
  %v1884 = vlaneseq
  %v1885 = vshrl.u32 %v1884, 7
  %v1886 = vsub.s32 %v1883, %v1885
  %v1887 = vrot.slane %v1873, %v1886
  %v1888 = vcombine.low %v63, %v159
  %v1889 = vcombine.high %v63, %v159
  %v1891 = vunpack.c.l.s4 1983009808
  %v1892 = vunpack.c.0.s8 %v1891
  %v1893 = vlaneseq
  %v1894 = vshrl.u32 %v1893, 7
  %v1895 = vsub.s32 %v1892, %v1894
  %v1896 = vrot.slane %v1888, %v1895
  %v1898 = vunpack.c.l.s4 1983009808
  %v1899 = vunpack.c.0.s8 %v1898
  %v1900 = vlaneseq
  %v1901 = vshrl.u32 %v1900, 7
  %v1902 = vsub.s32 %v1899, %v1901
  %v1903 = vrot.slane %v1889, %v1902
  %v1904 = vcombine.low %v207, %v303
  %v1905 = vcombine.high %v207, %v303
  %v1907 = vunpack.c.l.s4 1983009808
  %v1908 = vunpack.c.0.s8 %v1907
  %v1909 = vlaneseq
  %v1910 = vshrl.u32 %v1909, 7
  %v1911 = vsub.s32 %v1908, %v1910
  %v1912 = vrot.slane %v1904, %v1911
  %v1914 = vunpack.c.l.s4 1983009808
  %v1915 = vunpack.c.0.s8 %v1914
  %v1916 = vlaneseq
  %v1917 = vshrl.u32 %v1916, 7
  %v1918 = vsub.s32 %v1915, %v1917
  %v1919 = vrot.slane %v1905, %v1918
  %v1920 = vcombine.low %v255, %v351
  %v1921 = vcombine.high %v255, %v351
  %v1923 = vunpack.c.l.s4 1983009808
  %v1924 = vunpack.c.0.s8 %v1923
  %v1925 = vlaneseq
  %v1926 = vshrl.u32 %v1925, 7
  %v1927 = vsub.s32 %v1924, %v1926
  %v1928 = vrot.slane %v1920, %v1927
  %v1930 = vunpack.c.l.s4 1983009808
  %v1931 = vunpack.c.0.s8 %v1930
  %v1932 = vlaneseq
  %v1933 = vshrl.u32 %v1932, 7
  %v1934 = vsub.s32 %v1931, %v1933
  %v1935 = vrot.slane %v1921, %v1934
  %v1936 = vcombine.low %v1880, %v1896
  %v1937 = vcombine.high %v1880, %v1896
  %v1939 = vunpack.c.l.s4 1934713408
  %v1940 = vunpack.c.0.s8 %v1939
  %v1941 = vlaneseq
  %v1942 = vshrl.u32 %v1941, 7
  %v1943 = vsub.s32 %v1940, %v1942
  %v1944 = vrot.slane %v1936, %v1943
  %v1946 = vunpack.c.l.s4 1934713408
  %v1947 = vunpack.c.0.s8 %v1946
  %v1948 = vlaneseq
  %v1949 = vshrl.u32 %v1948, 7
  %v1950 = vsub.s32 %v1947, %v1949
  %v1951 = vrot.slane %v1937, %v1950
  %v1952 = vcombine.low %v1887, %v1903
  %v1953 = vcombine.high %v1887, %v1903
  %v1955 = vunpack.c.l.s4 1934713408
  %v1956 = vunpack.c.0.s8 %v1955
  %v1957 = vlaneseq
  %v1958 = vshrl.u32 %v1957, 7
  %v1959 = vsub.s32 %v1956, %v1958
  %v1960 = vrot.slane %v1952, %v1959
  %v1962 = vunpack.c.l.s4 1934713408
  %v1963 = vunpack.c.0.s8 %v1962
  %v1964 = vlaneseq
  %v1965 = vshrl.u32 %v1964, 7
  %v1966 = vsub.s32 %v1963, %v1965
  %v1967 = vrot.slane %v1953, %v1966
  %v1968 = vcombine.low %v1912, %v1928
  %v1969 = vcombine.high %v1912, %v1928
  %v1971 = vunpack.c.l.s4 1934713408
  %v1972 = vunpack.c.0.s8 %v1971
  %v1973 = vlaneseq
  %v1974 = vshrl.u32 %v1973, 7
  %v1975 = vsub.s32 %v1972, %v1974
  %v1976 = vrot.slane %v1968, %v1975
  %v1978 = vunpack.c.l.s4 1934713408
  %v1979 = vunpack.c.0.s8 %v1978
  %v1980 = vlaneseq
  %v1981 = vshrl.u32 %v1980, 7
  %v1982 = vsub.s32 %v1979, %v1981
  %v1983 = vrot.slane %v1969, %v1982
  %v1984 = vcombine.low %v1919, %v1935
  %v1985 = vcombine.high %v1919, %v1935
  %v1987 = vunpack.c.l.s4 1934713408
  %v1988 = vunpack.c.0.s8 %v1987
  %v1989 = vlaneseq
  %v1990 = vshrl.u32 %v1989, 7
  %v1991 = vsub.s32 %v1988, %v1990
  %v1992 = vrot.slane %v1984, %v1991
  %v1994 = vunpack.c.l.s4 1934713408
  %v1995 = vunpack.c.0.s8 %v1994
  %v1996 = vlaneseq
  %v1997 = vshrl.u32 %v1996, 7
  %v1998 = vsub.s32 %v1995, %v1997
  %v1999 = vrot.slane %v1985, %v1998
  %v2000 = vcombine.low %v1944, %v1976
  %v2001 = vcombine.high %v1944, %v1976
  %v2002 = vcombine.low %v1951, %v1983
  %v2003 = vcombine.high %v1951, %v1983
  %v2004 = vcombine.low %v1960, %v1992
  %v2005 = vcombine.high %v1960, %v1992
  %v2006 = vcombine.low %v1967, %v1999
  %v2007 = vcombine.high %v1967, %v1999
  %v2008 = vcombine.low %v20, %v113
  %v2009 = vcombine.high %v20, %v113
  %v2011 = vunpack.c.l.s4 1983009808
  %v2012 = vunpack.c.0.s8 %v2011
  %v2013 = vlaneseq
  %v2014 = vshrl.u32 %v2013, 7
  %v2015 = vsub.s32 %v2012, %v2014
  %v2016 = vrot.slane %v2008, %v2015
  %v2018 = vunpack.c.l.s4 1983009808
  %v2019 = vunpack.c.0.s8 %v2018
  %v2020 = vlaneseq
  %v2021 = vshrl.u32 %v2020, 7
  %v2022 = vsub.s32 %v2019, %v2021
  %v2023 = vrot.slane %v2009, %v2022
  %v2024 = vcombine.low %v65, %v161
  %v2025 = vcombine.high %v65, %v161
  %v2027 = vunpack.c.l.s4 1983009808
  %v2028 = vunpack.c.0.s8 %v2027
  %v2029 = vlaneseq
  %v2030 = vshrl.u32 %v2029, 7
  %v2031 = vsub.s32 %v2028, %v2030
  %v2032 = vrot.slane %v2024, %v2031
  %v2034 = vunpack.c.l.s4 1983009808
  %v2035 = vunpack.c.0.s8 %v2034
  %v2036 = vlaneseq
  %v2037 = vshrl.u32 %v2036, 7
  %v2038 = vsub.s32 %v2035, %v2037
  %v2039 = vrot.slane %v2025, %v2038
  %v2040 = vcombine.low %v209, %v305
  %v2041 = vcombine.high %v209, %v305
  %v2043 = vunpack.c.l.s4 1983009808
  %v2044 = vunpack.c.0.s8 %v2043
  %v2045 = vlaneseq
  %v2046 = vshrl.u32 %v2045, 7
  %v2047 = vsub.s32 %v2044, %v2046
  %v2048 = vrot.slane %v2040, %v2047
  %v2050 = vunpack.c.l.s4 1983009808
  %v2051 = vunpack.c.0.s8 %v2050
  %v2052 = vlaneseq
  %v2053 = vshrl.u32 %v2052, 7
  %v2054 = vsub.s32 %v2051, %v2053
  %v2055 = vrot.slane %v2041, %v2054
  %v2056 = vcombine.low %v257, %v353
  %v2057 = vcombine.high %v257, %v353
  %v2059 = vunpack.c.l.s4 1983009808
  %v2060 = vunpack.c.0.s8 %v2059
  %v2061 = vlaneseq
  %v2062 = vshrl.u32 %v2061, 7
  %v2063 = vsub.s32 %v2060, %v2062
  %v2064 = vrot.slane %v2056, %v2063
  %v2066 = vunpack.c.l.s4 1983009808
  %v2067 = vunpack.c.0.s8 %v2066
  %v2068 = vlaneseq
  %v2069 = vshrl.u32 %v2068, 7
  %v2070 = vsub.s32 %v2067, %v2069
  %v2071 = vrot.slane %v2057, %v2070
  %v2072 = vcombine.low %v2016, %v2032
  %v2073 = vcombine.high %v2016, %v2032
  %v2075 = vunpack.c.l.s4 1934713408
  %v2076 = vunpack.c.0.s8 %v2075
  %v2077 = vlaneseq
  %v2078 = vshrl.u32 %v2077, 7
  %v2079 = vsub.s32 %v2076, %v2078
  %v2080 = vrot.slane %v2072, %v2079
  %v2082 = vunpack.c.l.s4 1934713408
  %v2083 = vunpack.c.0.s8 %v2082
  %v2084 = vlaneseq
  %v2085 = vshrl.u32 %v2084, 7
  %v2086 = vsub.s32 %v2083, %v2085
  %v2087 = vrot.slane %v2073, %v2086
  %v2088 = vcombine.low %v2023, %v2039
  %v2089 = vcombine.high %v2023, %v2039
  %v2091 = vunpack.c.l.s4 1934713408
  %v2092 = vunpack.c.0.s8 %v2091
  %v2093 = vlaneseq
  %v2094 = vshrl.u32 %v2093, 7
  %v2095 = vsub.s32 %v2092, %v2094
  %v2096 = vrot.slane %v2088, %v2095
  %v2098 = vunpack.c.l.s4 1934713408
  %v2099 = vunpack.c.0.s8 %v2098
  %v2100 = vlaneseq
  %v2101 = vshrl.u32 %v2100, 7
  %v2102 = vsub.s32 %v2099, %v2101
  %v2103 = vrot.slane %v2089, %v2102
  %v2104 = vcombine.low %v2048, %v2064
  %v2105 = vcombine.high %v2048, %v2064
  %v2107 = vunpack.c.l.s4 1934713408
  %v2108 = vunpack.c.0.s8 %v2107
  %v2109 = vlaneseq
  %v2110 = vshrl.u32 %v2109, 7
  %v2111 = vsub.s32 %v2108, %v2110
  %v2112 = vrot.slane %v2104, %v2111
  %v2114 = vunpack.c.l.s4 1934713408
  %v2115 = vunpack.c.0.s8 %v2114
  %v2116 = vlaneseq
  %v2117 = vshrl.u32 %v2116, 7
  %v2118 = vsub.s32 %v2115, %v2117
  %v2119 = vrot.slane %v2105, %v2118
  %v2120 = vcombine.low %v2055, %v2071
  %v2121 = vcombine.high %v2055, %v2071
  %v2123 = vunpack.c.l.s4 1934713408
  %v2124 = vunpack.c.0.s8 %v2123
  %v2125 = vlaneseq
  %v2126 = vshrl.u32 %v2125, 7
  %v2127 = vsub.s32 %v2124, %v2126
  %v2128 = vrot.slane %v2120, %v2127
  %v2130 = vunpack.c.l.s4 1934713408
  %v2131 = vunpack.c.0.s8 %v2130
  %v2132 = vlaneseq
  %v2133 = vshrl.u32 %v2132, 7
  %v2134 = vsub.s32 %v2131, %v2133
  %v2135 = vrot.slane %v2121, %v2134
  %v2136 = vcombine.low %v2080, %v2112
  %v2137 = vcombine.high %v2080, %v2112
  %v2138 = vcombine.low %v2087, %v2119
  %v2139 = vcombine.high %v2087, %v2119
  %v2140 = vcombine.low %v2096, %v2128
  %v2141 = vcombine.high %v2096, %v2128
  %v2142 = vcombine.low %v2103, %v2135
  %v2143 = vcombine.high %v2103, %v2135
  %v2144 = vcombine.low %v21, %v115
  %v2145 = vcombine.high %v21, %v115
  %v2147 = vunpack.c.l.s4 1983009808
  %v2148 = vunpack.c.0.s8 %v2147
  %v2149 = vlaneseq
  %v2150 = vshrl.u32 %v2149, 7
  %v2151 = vsub.s32 %v2148, %v2150
  %v2152 = vrot.slane %v2144, %v2151
  %v2154 = vunpack.c.l.s4 1983009808
  %v2155 = vunpack.c.0.s8 %v2154
  %v2156 = vlaneseq
  %v2157 = vshrl.u32 %v2156, 7
  %v2158 = vsub.s32 %v2155, %v2157
  %v2159 = vrot.slane %v2145, %v2158
  %v2160 = vcombine.low %v67, %v163
  %v2161 = vcombine.high %v67, %v163
  %v2163 = vunpack.c.l.s4 1983009808
  %v2164 = vunpack.c.0.s8 %v2163
  %v2165 = vlaneseq
  %v2166 = vshrl.u32 %v2165, 7
  %v2167 = vsub.s32 %v2164, %v2166
  %v2168 = vrot.slane %v2160, %v2167
  %v2170 = vunpack.c.l.s4 1983009808
  %v2171 = vunpack.c.0.s8 %v2170
  %v2172 = vlaneseq
  %v2173 = vshrl.u32 %v2172, 7
  %v2174 = vsub.s32 %v2171, %v2173
  %v2175 = vrot.slane %v2161, %v2174
  %v2176 = vcombine.low %v211, %v307
  %v2177 = vcombine.high %v211, %v307
  %v2179 = vunpack.c.l.s4 1983009808
  %v2180 = vunpack.c.0.s8 %v2179
  %v2181 = vlaneseq
  %v2182 = vshrl.u32 %v2181, 7
  %v2183 = vsub.s32 %v2180, %v2182
  %v2184 = vrot.slane %v2176, %v2183
  %v2186 = vunpack.c.l.s4 1983009808
  %v2187 = vunpack.c.0.s8 %v2186
  %v2188 = vlaneseq
  %v2189 = vshrl.u32 %v2188, 7
  %v2190 = vsub.s32 %v2187, %v2189
  %v2191 = vrot.slane %v2177, %v2190
  %v2192 = vcombine.low %v259, %v355
  %v2193 = vcombine.high %v259, %v355
  %v2195 = vunpack.c.l.s4 1983009808
  %v2196 = vunpack.c.0.s8 %v2195
  %v2197 = vlaneseq
  %v2198 = vshrl.u32 %v2197, 7
  %v2199 = vsub.s32 %v2196, %v2198
  %v2200 = vrot.slane %v2192, %v2199
  %v2202 = vunpack.c.l.s4 1983009808
  %v2203 = vunpack.c.0.s8 %v2202
  %v2204 = vlaneseq
  %v2205 = vshrl.u32 %v2204, 7
  %v2206 = vsub.s32 %v2203, %v2205
  %v2207 = vrot.slane %v2193, %v2206
  %v2208 = vcombine.low %v2152, %v2168
  %v2209 = vcombine.high %v2152, %v2168
  %v2211 = vunpack.c.l.s4 1934713408
  %v2212 = vunpack.c.0.s8 %v2211
  %v2213 = vlaneseq
  %v2214 = vshrl.u32 %v2213, 7
  %v2215 = vsub.s32 %v2212, %v2214
  %v2216 = vrot.slane %v2208, %v2215
  %v2218 = vunpack.c.l.s4 1934713408
  %v2219 = vunpack.c.0.s8 %v2218
  %v2220 = vlaneseq
  %v2221 = vshrl.u32 %v2220, 7
  %v2222 = vsub.s32 %v2219, %v2221
  %v2223 = vrot.slane %v2209, %v2222
  %v2224 = vcombine.low %v2159, %v2175
  %v2225 = vcombine.high %v2159, %v2175
  %v2227 = vunpack.c.l.s4 1934713408
  %v2228 = vunpack.c.0.s8 %v2227
  %v2229 = vlaneseq
  %v2230 = vshrl.u32 %v2229, 7
  %v2231 = vsub.s32 %v2228, %v2230
  %v2232 = vrot.slane %v2224, %v2231
  %v2234 = vunpack.c.l.s4 1934713408
  %v2235 = vunpack.c.0.s8 %v2234
  %v2236 = vlaneseq
  %v2237 = vshrl.u32 %v2236, 7
  %v2238 = vsub.s32 %v2235, %v2237
  %v2239 = vrot.slane %v2225, %v2238
  %v2240 = vcombine.low %v2184, %v2200
  %v2241 = vcombine.high %v2184, %v2200
  %v2243 = vunpack.c.l.s4 1934713408
  %v2244 = vunpack.c.0.s8 %v2243
  %v2245 = vlaneseq
  %v2246 = vshrl.u32 %v2245, 7
  %v2247 = vsub.s32 %v2244, %v2246
  %v2248 = vrot.slane %v2240, %v2247
  %v2250 = vunpack.c.l.s4 1934713408
  %v2251 = vunpack.c.0.s8 %v2250
  %v2252 = vlaneseq
  %v2253 = vshrl.u32 %v2252, 7
  %v2254 = vsub.s32 %v2251, %v2253
  %v2255 = vrot.slane %v2241, %v2254
  %v2256 = vcombine.low %v2191, %v2207
  %v2257 = vcombine.high %v2191, %v2207
  %v2259 = vunpack.c.l.s4 1934713408
  %v2260 = vunpack.c.0.s8 %v2259
  %v2261 = vlaneseq
  %v2262 = vshrl.u32 %v2261, 7
  %v2263 = vsub.s32 %v2260, %v2262
  %v2264 = vrot.slane %v2256, %v2263
  %v2266 = vunpack.c.l.s4 1934713408
  %v2267 = vunpack.c.0.s8 %v2266
  %v2268 = vlaneseq
  %v2269 = vshrl.u32 %v2268, 7
  %v2270 = vsub.s32 %v2267, %v2269
  %v2271 = vrot.slane %v2257, %v2270
  %v2272 = vcombine.low %v2216, %v2248
  %v2273 = vcombine.high %v2216, %v2248
  %v2274 = vcombine.low %v2223, %v2255
  %v2275 = vcombine.high %v2223, %v2255
  %v2276 = vcombine.low %v2232, %v2264
  %v2277 = vcombine.high %v2232, %v2264
  %v2278 = vcombine.low %v2239, %v2271
  %v2279 = vcombine.high %v2239, %v2271
  %v2280 = vcombine.low %v22, %v117
  %v2281 = vcombine.high %v22, %v117
  %v2283 = vunpack.c.l.s4 1983009808
  %v2284 = vunpack.c.0.s8 %v2283
  %v2285 = vlaneseq
  %v2286 = vshrl.u32 %v2285, 7
  %v2287 = vsub.s32 %v2284, %v2286
  %v2288 = vrot.slane %v2280, %v2287
  %v2290 = vunpack.c.l.s4 1983009808
  %v2291 = vunpack.c.0.s8 %v2290
  %v2292 = vlaneseq
  %v2293 = vshrl.u32 %v2292, 7
  %v2294 = vsub.s32 %v2291, %v2293
  %v2295 = vrot.slane %v2281, %v2294
  %v2296 = vcombine.low %v69, %v165
  %v2297 = vcombine.high %v69, %v165
  %v2299 = vunpack.c.l.s4 1983009808
  %v2300 = vunpack.c.0.s8 %v2299
  %v2301 = vlaneseq
  %v2302 = vshrl.u32 %v2301, 7
  %v2303 = vsub.s32 %v2300, %v2302
  %v2304 = vrot.slane %v2296, %v2303
  %v2306 = vunpack.c.l.s4 1983009808
  %v2307 = vunpack.c.0.s8 %v2306
  %v2308 = vlaneseq
  %v2309 = vshrl.u32 %v2308, 7
  %v2310 = vsub.s32 %v2307, %v2309
  %v2311 = vrot.slane %v2297, %v2310
  %v2312 = vcombine.low %v213, %v309
  %v2313 = vcombine.high %v213, %v309
  %v2315 = vunpack.c.l.s4 1983009808
  %v2316 = vunpack.c.0.s8 %v2315
  %v2317 = vlaneseq
  %v2318 = vshrl.u32 %v2317, 7
  %v2319 = vsub.s32 %v2316, %v2318
  %v2320 = vrot.slane %v2312, %v2319
  %v2322 = vunpack.c.l.s4 1983009808
  %v2323 = vunpack.c.0.s8 %v2322
  %v2324 = vlaneseq
  %v2325 = vshrl.u32 %v2324, 7
  %v2326 = vsub.s32 %v2323, %v2325
  %v2327 = vrot.slane %v2313, %v2326
  %v2328 = vcombine.low %v261, %v357
  %v2329 = vcombine.high %v261, %v357
  %v2331 = vunpack.c.l.s4 1983009808
  %v2332 = vunpack.c.0.s8 %v2331
  %v2333 = vlaneseq
  %v2334 = vshrl.u32 %v2333, 7
  %v2335 = vsub.s32 %v2332, %v2334
  %v2336 = vrot.slane %v2328, %v2335
  %v2338 = vunpack.c.l.s4 1983009808
  %v2339 = vunpack.c.0.s8 %v2338
  %v2340 = vlaneseq
  %v2341 = vshrl.u32 %v2340, 7
  %v2342 = vsub.s32 %v2339, %v2341
  %v2343 = vrot.slane %v2329, %v2342
  %v2344 = vcombine.low %v2288, %v2304
  %v2345 = vcombine.high %v2288, %v2304
  %v2347 = vunpack.c.l.s4 1934713408
  %v2348 = vunpack.c.0.s8 %v2347
  %v2349 = vlaneseq
  %v2350 = vshrl.u32 %v2349, 7
  %v2351 = vsub.s32 %v2348, %v2350
  %v2352 = vrot.slane %v2344, %v2351
  %v2354 = vunpack.c.l.s4 1934713408
  %v2355 = vunpack.c.0.s8 %v2354
  %v2356 = vlaneseq
  %v2357 = vshrl.u32 %v2356, 7
  %v2358 = vsub.s32 %v2355, %v2357
  %v2359 = vrot.slane %v2345, %v2358
  %v2360 = vcombine.low %v2295, %v2311
  %v2361 = vcombine.high %v2295, %v2311
  %v2363 = vunpack.c.l.s4 1934713408
  %v2364 = vunpack.c.0.s8 %v2363
  %v2365 = vlaneseq
  %v2366 = vshrl.u32 %v2365, 7
  %v2367 = vsub.s32 %v2364, %v2366
  %v2368 = vrot.slane %v2360, %v2367
  %v2370 = vunpack.c.l.s4 1934713408
  %v2371 = vunpack.c.0.s8 %v2370
  %v2372 = vlaneseq
  %v2373 = vshrl.u32 %v2372, 7
  %v2374 = vsub.s32 %v2371, %v2373
  %v2375 = vrot.slane %v2361, %v2374
  %v2376 = vcombine.low %v2320, %v2336
  %v2377 = vcombine.high %v2320, %v2336
  %v2379 = vunpack.c.l.s4 1934713408
  %v2380 = vunpack.c.0.s8 %v2379
  %v2381 = vlaneseq
  %v2382 = vshrl.u32 %v2381, 7
  %v2383 = vsub.s32 %v2380, %v2382
  %v2384 = vrot.slane %v2376, %v2383
  %v2386 = vunpack.c.l.s4 1934713408
  %v2387 = vunpack.c.0.s8 %v2386
  %v2388 = vlaneseq
  %v2389 = vshrl.u32 %v2388, 7
  %v2390 = vsub.s32 %v2387, %v2389
  %v2391 = vrot.slane %v2377, %v2390
  %v2392 = vcombine.low %v2327, %v2343
  %v2393 = vcombine.high %v2327, %v2343
  %v2395 = vunpack.c.l.s4 1934713408
  %v2396 = vunpack.c.0.s8 %v2395
  %v2397 = vlaneseq
  %v2398 = vshrl.u32 %v2397, 7
  %v2399 = vsub.s32 %v2396, %v2398
  %v2400 = vrot.slane %v2392, %v2399
  %v2402 = vunpack.c.l.s4 1934713408
  %v2403 = vunpack.c.0.s8 %v2402
  %v2404 = vlaneseq
  %v2405 = vshrl.u32 %v2404, 7
  %v2406 = vsub.s32 %v2403, %v2405
  %v2407 = vrot.slane %v2393, %v2406
  %v2408 = vcombine.low %v2352, %v2384
  %v2409 = vcombine.high %v2352, %v2384
  %v2410 = vcombine.low %v2359, %v2391
  %v2411 = vcombine.high %v2359, %v2391
  %v2412 = vcombine.low %v2368, %v2400
  %v2413 = vcombine.high %v2368, %v2400
  %v2414 = vcombine.low %v2375, %v2407
  %v2415 = vcombine.high %v2375, %v2407
  %v2416 = vcombine.low %v23, %v119
  %v2417 = vcombine.high %v23, %v119
  %v2419 = vunpack.c.l.s4 1983009808
  %v2420 = vunpack.c.0.s8 %v2419
  %v2421 = vlaneseq
  %v2422 = vshrl.u32 %v2421, 7
  %v2423 = vsub.s32 %v2420, %v2422
  %v2424 = vrot.slane %v2416, %v2423
  %v2426 = vunpack.c.l.s4 1983009808
  %v2427 = vunpack.c.0.s8 %v2426
  %v2428 = vlaneseq
  %v2429 = vshrl.u32 %v2428, 7
  %v2430 = vsub.s32 %v2427, %v2429
  %v2431 = vrot.slane %v2417, %v2430
  %v2432 = vcombine.low %v71, %v167
  %v2433 = vcombine.high %v71, %v167
  %v2435 = vunpack.c.l.s4 1983009808
  %v2436 = vunpack.c.0.s8 %v2435
  %v2437 = vlaneseq
  %v2438 = vshrl.u32 %v2437, 7
  %v2439 = vsub.s32 %v2436, %v2438
  %v2440 = vrot.slane %v2432, %v2439
  %v2442 = vunpack.c.l.s4 1983009808
  %v2443 = vunpack.c.0.s8 %v2442
  %v2444 = vlaneseq
  %v2445 = vshrl.u32 %v2444, 7
  %v2446 = vsub.s32 %v2443, %v2445
  %v2447 = vrot.slane %v2433, %v2446
  %v2448 = vcombine.low %v215, %v311
  %v2449 = vcombine.high %v215, %v311
  %v2451 = vunpack.c.l.s4 1983009808
  %v2452 = vunpack.c.0.s8 %v2451
  %v2453 = vlaneseq
  %v2454 = vshrl.u32 %v2453, 7
  %v2455 = vsub.s32 %v2452, %v2454
  %v2456 = vrot.slane %v2448, %v2455
  %v2458 = vunpack.c.l.s4 1983009808
  %v2459 = vunpack.c.0.s8 %v2458
  %v2460 = vlaneseq
  %v2461 = vshrl.u32 %v2460, 7
  %v2462 = vsub.s32 %v2459, %v2461
  %v2463 = vrot.slane %v2449, %v2462
  %v2464 = vcombine.low %v263, %v359
  %v2465 = vcombine.high %v263, %v359
  %v2467 = vunpack.c.l.s4 1983009808
  %v2468 = vunpack.c.0.s8 %v2467
  %v2469 = vlaneseq
  %v2470 = vshrl.u32 %v2469, 7
  %v2471 = vsub.s32 %v2468, %v2470
  %v2472 = vrot.slane %v2464, %v2471
  %v2474 = vunpack.c.l.s4 1983009808
  %v2475 = vunpack.c.0.s8 %v2474
  %v2476 = vlaneseq
  %v2477 = vshrl.u32 %v2476, 7
  %v2478 = vsub.s32 %v2475, %v2477
  %v2479 = vrot.slane %v2465, %v2478
  %v2480 = vcombine.low %v2424, %v2440
  %v2481 = vcombine.high %v2424, %v2440
  %v2483 = vunpack.c.l.s4 1934713408
  %v2484 = vunpack.c.0.s8 %v2483
  %v2485 = vlaneseq
  %v2486 = vshrl.u32 %v2485, 7
  %v2487 = vsub.s32 %v2484, %v2486
  %v2488 = vrot.slane %v2480, %v2487
  %v2490 = vunpack.c.l.s4 1934713408
  %v2491 = vunpack.c.0.s8 %v2490
  %v2492 = vlaneseq
  %v2493 = vshrl.u32 %v2492, 7
  %v2494 = vsub.s32 %v2491, %v2493
  %v2495 = vrot.slane %v2481, %v2494
  %v2496 = vcombine.low %v2431, %v2447
  %v2497 = vcombine.high %v2431, %v2447
  %v2499 = vunpack.c.l.s4 1934713408
  %v2500 = vunpack.c.0.s8 %v2499
  %v2501 = vlaneseq
  %v2502 = vshrl.u32 %v2501, 7
  %v2503 = vsub.s32 %v2500, %v2502
  %v2504 = vrot.slane %v2496, %v2503
  %v2506 = vunpack.c.l.s4 1934713408
  %v2507 = vunpack.c.0.s8 %v2506
  %v2508 = vlaneseq
  %v2509 = vshrl.u32 %v2508, 7
  %v2510 = vsub.s32 %v2507, %v2509
  %v2511 = vrot.slane %v2497, %v2510
  %v2512 = vcombine.low %v2456, %v2472
  %v2513 = vcombine.high %v2456, %v2472
  %v2515 = vunpack.c.l.s4 1934713408
  %v2516 = vunpack.c.0.s8 %v2515
  %v2517 = vlaneseq
  %v2518 = vshrl.u32 %v2517, 7
  %v2519 = vsub.s32 %v2516, %v2518
  %v2520 = vrot.slane %v2512, %v2519
  %v2522 = vunpack.c.l.s4 1934713408
  %v2523 = vunpack.c.0.s8 %v2522
  %v2524 = vlaneseq
  %v2525 = vshrl.u32 %v2524, 7
  %v2526 = vsub.s32 %v2523, %v2525
  %v2527 = vrot.slane %v2513, %v2526
  %v2528 = vcombine.low %v2463, %v2479
  %v2529 = vcombine.high %v2463, %v2479
  %v2531 = vunpack.c.l.s4 1934713408
  %v2532 = vunpack.c.0.s8 %v2531
  %v2533 = vlaneseq
  %v2534 = vshrl.u32 %v2533, 7
  %v2535 = vsub.s32 %v2532, %v2534
  %v2536 = vrot.slane %v2528, %v2535
  %v2538 = vunpack.c.l.s4 1934713408
  %v2539 = vunpack.c.0.s8 %v2538
  %v2540 = vlaneseq
  %v2541 = vshrl.u32 %v2540, 7
  %v2542 = vsub.s32 %v2539, %v2541
  %v2543 = vrot.slane %v2529, %v2542
  %v2544 = vcombine.low %v2488, %v2520
  %v2545 = vcombine.high %v2488, %v2520
  %v2546 = vcombine.low %v2495, %v2527
  %v2547 = vcombine.high %v2495, %v2527
  %v2548 = vcombine.low %v2504, %v2536
  %v2549 = vcombine.high %v2504, %v2536
  %v2550 = vcombine.low %v2511, %v2543
  %v2551 = vcombine.high %v2511, %v2543
  %vm2552 = vcmask 15360
  %v2553 = vsel %vm2552, %v504, -inf
  %v2554 = vsel %vm2552, %v505, -inf
  %v2555 = vmax.f32 %v2553, %v2554
  %v2556 = vsel %vm2552, %v506, -inf
  %v2557 = vsel %vm2552, %v507, -inf
  %v2558 = vmax.f32 %v2556, %v2557
  %v2559 = vsel %vm2552, %v508, -inf
  %v2560 = vsel %vm2552, %v509, -inf
  %v2561 = vmax.f32 %v2559, %v2560
  %v2562 = vsel %vm2552, %v510, -inf
  %v2563 = vsel %vm2552, %v511, -inf
  %v2564 = vmax.f32 %v2562, %v2563
  %v2565 = vsel %vm2552, %v640, -inf
  %v2566 = vsel %vm2552, %v641, -inf
  %v2567 = vmax.f32 %v2565, %v2566
  %v2568 = vsel %vm2552, %v642, -inf
  %v2569 = vsel %vm2552, %v643, -inf
  %v2570 = vmax.f32 %v2568, %v2569
  %v2571 = vsel %vm2552, %v644, -inf
  %v2572 = vsel %vm2552, %v645, -inf
  %v2573 = vmax.f32 %v2571, %v2572
  %v2574 = vsel %vm2552, %v646, -inf
  %v2575 = vsel %vm2552, %v647, -inf
  %v2576 = vmax.f32 %v2574, %v2575
  %v2577 = vsel %vm2552, %v776, -inf
  %v2578 = vsel %vm2552, %v777, -inf
  %v2579 = vmax.f32 %v2577, %v2578
  %v2580 = vsel %vm2552, %v778, -inf
  %v2581 = vsel %vm2552, %v779, -inf
  %v2582 = vmax.f32 %v2580, %v2581
  %v2583 = vsel %vm2552, %v780, -inf
  %v2584 = vsel %vm2552, %v781, -inf
  %v2585 = vmax.f32 %v2583, %v2584
  %v2586 = vsel %vm2552, %v782, -inf
  %v2587 = vsel %vm2552, %v783, -inf
  %v2588 = vmax.f32 %v2586, %v2587
  %v2589 = vsel %vm2552, %v912, -inf
  %v2590 = vsel %vm2552, %v913, -inf
  %v2591 = vmax.f32 %v2589, %v2590
  %v2592 = vsel %vm2552, %v914, -inf
  %v2593 = vsel %vm2552, %v915, -inf
  %v2594 = vmax.f32 %v2592, %v2593
  %v2595 = vsel %vm2552, %v916, -inf
  %v2596 = vsel %vm2552, %v917, -inf
  %v2597 = vmax.f32 %v2595, %v2596
  %v2598 = vsel %vm2552, %v918, -inf
  %v2599 = vsel %vm2552, %v919, -inf
  %v2600 = vmax.f32 %v2598, %v2599
  %v2601 = vsel %vm2552, %v1048, -inf
  %v2602 = vsel %vm2552, %v1049, -inf
  %v2603 = vmax.f32 %v2601, %v2602
  %v2604 = vsel %vm2552, %v1050, -inf
  %v2605 = vsel %vm2552, %v1051, -inf
  %v2606 = vmax.f32 %v2604, %v2605
  %v2607 = vsel %vm2552, %v1052, -inf
  %v2608 = vsel %vm2552, %v1053, -inf
  %v2609 = vmax.f32 %v2607, %v2608
  %v2610 = vsel %vm2552, %v1054, -inf
  %v2611 = vsel %vm2552, %v1055, -inf
  %v2612 = vmax.f32 %v2610, %v2611
  %v2613 = vsel %vm2552, %v1184, -inf
  %v2614 = vsel %vm2552, %v1185, -inf
  %v2615 = vmax.f32 %v2613, %v2614
  %v2616 = vsel %vm2552, %v1186, -inf
  %v2617 = vsel %vm2552, %v1187, -inf
  %v2618 = vmax.f32 %v2616, %v2617
  %v2619 = vsel %vm2552, %v1188, -inf
  %v2620 = vsel %vm2552, %v1189, -inf
  %v2621 = vmax.f32 %v2619, %v2620
  %v2622 = vsel %vm2552, %v1190, -inf
  %v2623 = vsel %vm2552, %v1191, -inf
  %v2624 = vmax.f32 %v2622, %v2623
  %v2625 = vsel %vm2552, %v1320, -inf
  %v2626 = vsel %vm2552, %v1321, -inf
  %v2627 = vmax.f32 %v2625, %v2626
  %v2628 = vsel %vm2552, %v1322, -inf
  %v2629 = vsel %vm2552, %v1323, -inf
  %v2630 = vmax.f32 %v2628, %v2629
  %v2631 = vsel %vm2552, %v1324, -inf
  %v2632 = vsel %vm2552, %v1325, -inf
  %v2633 = vmax.f32 %v2631, %v2632
  %v2634 = vsel %vm2552, %v1326, -inf
  %v2635 = vsel %vm2552, %v1327, -inf
  %v2636 = vmax.f32 %v2634, %v2635
  %v2637 = vsel %vm2552, %v1456, -inf
  %v2638 = vsel %vm2552, %v1457, -inf
  %v2639 = vmax.f32 %v2637, %v2638
  %v2640 = vsel %vm2552, %v1458, -inf
  %v2641 = vsel %vm2552, %v1459, -inf
  %v2642 = vmax.f32 %v2640, %v2641
  %v2643 = vsel %vm2552, %v1460, -inf
  %v2644 = vsel %vm2552, %v1461, -inf
  %v2645 = vmax.f32 %v2643, %v2644
  %v2646 = vsel %vm2552, %v1462, -inf
  %v2647 = vsel %vm2552, %v1463, -inf
  %v2648 = vmax.f32 %v2646, %v2647
  %v2649 = vsel %vm2552, %v1592, -inf
  %v2650 = vsel %vm2552, %v1593, -inf
  %v2651 = vmax.f32 %v2649, %v2650
  %v2652 = vsel %vm2552, %v1594, -inf
  %v2653 = vsel %vm2552, %v1595, -inf
  %v2654 = vmax.f32 %v2652, %v2653
  %v2655 = vsel %vm2552, %v1596, -inf
  %v2656 = vsel %vm2552, %v1597, -inf
  %v2657 = vmax.f32 %v2655, %v2656
  %v2658 = vsel %vm2552, %v1598, -inf
  %v2659 = vsel %vm2552, %v1599, -inf
  %v2660 = vmax.f32 %v2658, %v2659
  %v2661 = vsel %vm2552, %v1728, -inf
  %v2662 = vsel %vm2552, %v1729, -inf
  %v2663 = vmax.f32 %v2661, %v2662
  %v2664 = vsel %vm2552, %v1730, -inf
  %v2665 = vsel %vm2552, %v1731, -inf
  %v2666 = vmax.f32 %v2664, %v2665
  %v2667 = vsel %vm2552, %v1732, -inf
  %v2668 = vsel %vm2552, %v1733, -inf
  %v2669 = vmax.f32 %v2667, %v2668
  %v2670 = vsel %vm2552, %v1734, -inf
  %v2671 = vsel %vm2552, %v1735, -inf
  %v2672 = vmax.f32 %v2670, %v2671
  %v2673 = vsel %vm2552, %v1864, -inf
  %v2674 = vsel %vm2552, %v1865, -inf
  %v2675 = vmax.f32 %v2673, %v2674
  %v2676 = vsel %vm2552, %v1866, -inf
  %v2677 = vsel %vm2552, %v1867, -inf
  %v2678 = vmax.f32 %v2676, %v2677
  %v2679 = vsel %vm2552, %v1868, -inf
  %v2680 = vsel %vm2552, %v1869, -inf
  %v2681 = vmax.f32 %v2679, %v2680
  %v2682 = vsel %vm2552, %v1870, -inf
  %v2683 = vsel %vm2552, %v1871, -inf
  %v2684 = vmax.f32 %v2682, %v2683
  %v2685 = vsel %vm2552, %v2000, -inf
  %v2686 = vsel %vm2552, %v2001, -inf
  %v2687 = vmax.f32 %v2685, %v2686
  %v2688 = vsel %vm2552, %v2002, -inf
  %v2689 = vsel %vm2552, %v2003, -inf
  %v2690 = vmax.f32 %v2688, %v2689
  %v2691 = vsel %vm2552, %v2004, -inf
  %v2692 = vsel %vm2552, %v2005, -inf
  %v2693 = vmax.f32 %v2691, %v2692
  %v2694 = vsel %vm2552, %v2006, -inf
  %v2695 = vsel %vm2552, %v2007, -inf
  %v2696 = vmax.f32 %v2694, %v2695
  %v2697 = vsel %vm2552, %v2136, -inf
  %v2698 = vsel %vm2552, %v2137, -inf
  %v2699 = vmax.f32 %v2697, %v2698
  %v2700 = vsel %vm2552, %v2138, -inf
  %v2701 = vsel %vm2552, %v2139, -inf
  %v2702 = vmax.f32 %v2700, %v2701
  %v2703 = vsel %vm2552, %v2140, -inf
  %v2704 = vsel %vm2552, %v2141, -inf
  %v2705 = vmax.f32 %v2703, %v2704
  %v2706 = vsel %vm2552, %v2142, -inf
  %v2707 = vsel %vm2552, %v2143, -inf
  %v2708 = vmax.f32 %v2706, %v2707
  %v2709 = vsel %vm2552, %v2272, -inf
  %v2710 = vsel %vm2552, %v2273, -inf
  %v2711 = vmax.f32 %v2709, %v2710
  %v2712 = vsel %vm2552, %v2274, -inf
  %v2713 = vsel %vm2552, %v2275, -inf
  %v2714 = vmax.f32 %v2712, %v2713
  %v2715 = vsel %vm2552, %v2276, -inf
  %v2716 = vsel %vm2552, %v2277, -inf
  %v2717 = vmax.f32 %v2715, %v2716
  %v2718 = vsel %vm2552, %v2278, -inf
  %v2719 = vsel %vm2552, %v2279, -inf
  %v2720 = vmax.f32 %v2718, %v2719
  %v2721 = vsel %vm2552, %v2408, -inf
  %v2722 = vsel %vm2552, %v2409, -inf
  %v2723 = vmax.f32 %v2721, %v2722
  %v2724 = vsel %vm2552, %v2410, -inf
  %v2725 = vsel %vm2552, %v2411, -inf
  %v2726 = vmax.f32 %v2724, %v2725
  %v2727 = vsel %vm2552, %v2412, -inf
  %v2728 = vsel %vm2552, %v2413, -inf
  %v2729 = vmax.f32 %v2727, %v2728
  %v2730 = vsel %vm2552, %v2414, -inf
  %v2731 = vsel %vm2552, %v2415, -inf
  %v2732 = vmax.f32 %v2730, %v2731
  %v2733 = vsel %vm2552, %v2544, -inf
  %v2734 = vsel %vm2552, %v2545, -inf
  %v2735 = vmax.f32 %v2733, %v2734
  %v2736 = vsel %vm2552, %v2546, -inf
  %v2737 = vsel %vm2552, %v2547, -inf
  %v2738 = vmax.f32 %v2736, %v2737
  %v2739 = vsel %vm2552, %v2548, -inf
  %v2740 = vsel %vm2552, %v2549, -inf
  %v2741 = vmax.f32 %v2739, %v2740
  %v2742 = vsel %vm2552, %v2550, -inf
  %v2743 = vsel %vm2552, %v2551, -inf
  %v2744 = vmax.f32 %v2742, %v2743
  %v2745 = vsel %vm2552, %v2555, -inf
  %2746 = vmax.xlane.f32.xlu0 %v2745
  %v2747 = vpop.xlane.xlu0 %2746
  %v2748 = vsel %vm2552, %v2558, -inf
  %2749 = vmax.xlane.f32.xlu0 %v2748
  %v2750 = vpop.xlane.xlu0 %2749
  %v2751 = vsel %vm2552, %v2561, -inf
  %2752 = vmax.xlane.f32.xlu0 %v2751
  %v2753 = vpop.xlane.xlu0 %2752
  %v2754 = vsel %vm2552, %v2564, -inf
  %2755 = vmax.xlane.f32.xlu0 %v2754
  %v2756 = vpop.xlane.xlu0 %2755
  %v2757 = vsel %vm2552, %v2567, -inf
  %2758 = vmax.xlane.f32.xlu0 %v2757
  %v2759 = vpop.xlane.xlu0 %2758
  %v2760 = vsel %vm2552, %v2570, -inf
  %2761 = vmax.xlane.f32.xlu0 %v2760
  %v2762 = vpop.xlane.xlu0 %2761
  %v2763 = vsel %vm2552, %v2573, -inf
  %2764 = vmax.xlane.f32.xlu0 %v2763
  %v2765 = vpop.xlane.xlu0 %2764
  %v2766 = vsel %vm2552, %v2576, -inf
  %2767 = vmax.xlane.f32.xlu0 %v2766
  %v2768 = vpop.xlane.xlu0 %2767
  %v2769 = vsel %vm2552, %v2579, -inf
  %2770 = vmax.xlane.f32.xlu0 %v2769
  %v2771 = vpop.xlane.xlu0 %2770
  %v2772 = vsel %vm2552, %v2582, -inf
  %2773 = vmax.xlane.f32.xlu0 %v2772
  %v2774 = vpop.xlane.xlu0 %2773
  %v2775 = vsel %vm2552, %v2585, -inf
  %2776 = vmax.xlane.f32.xlu0 %v2775
  %v2777 = vpop.xlane.xlu0 %2776
  %v2778 = vsel %vm2552, %v2588, -inf
  %2779 = vmax.xlane.f32.xlu0 %v2778
  %v2780 = vpop.xlane.xlu0 %2779
  %v2781 = vsel %vm2552, %v2591, -inf
  %2782 = vmax.xlane.f32.xlu0 %v2781
  %v2783 = vpop.xlane.xlu0 %2782
  %v2784 = vsel %vm2552, %v2594, -inf
  %2785 = vmax.xlane.f32.xlu0 %v2784
  %v2786 = vpop.xlane.xlu0 %2785
  %v2787 = vsel %vm2552, %v2597, -inf
  %2788 = vmax.xlane.f32.xlu0 %v2787
  %v2789 = vpop.xlane.xlu0 %2788
  %v2790 = vsel %vm2552, %v2600, -inf
  %2791 = vmax.xlane.f32.xlu0 %v2790
  %v2792 = vpop.xlane.xlu0 %2791
  %v2793 = vsel %vm2552, %v2603, -inf
  %2794 = vmax.xlane.f32.xlu0 %v2793
  %v2795 = vpop.xlane.xlu0 %2794
  %v2796 = vsel %vm2552, %v2606, -inf
  %2797 = vmax.xlane.f32.xlu0 %v2796
  %v2798 = vpop.xlane.xlu0 %2797
  %v2799 = vsel %vm2552, %v2609, -inf
  %2800 = vmax.xlane.f32.xlu0 %v2799
  %v2801 = vpop.xlane.xlu0 %2800
  %v2802 = vsel %vm2552, %v2612, -inf
  %2803 = vmax.xlane.f32.xlu0 %v2802
  %v2804 = vpop.xlane.xlu0 %2803
  %v2805 = vsel %vm2552, %v2615, -inf
  %2806 = vmax.xlane.f32.xlu0 %v2805
  %v2807 = vpop.xlane.xlu0 %2806
  %v2808 = vsel %vm2552, %v2618, -inf
  %2809 = vmax.xlane.f32.xlu0 %v2808
  %v2810 = vpop.xlane.xlu0 %2809
  %v2811 = vsel %vm2552, %v2621, -inf
  %2812 = vmax.xlane.f32.xlu0 %v2811
  %v2813 = vpop.xlane.xlu0 %2812
  %v2814 = vsel %vm2552, %v2624, -inf
  %2815 = vmax.xlane.f32.xlu0 %v2814
  %v2816 = vpop.xlane.xlu0 %2815
  %v2817 = vsel %vm2552, %v2627, -inf
  %2818 = vmax.xlane.f32.xlu0 %v2817
  %v2819 = vpop.xlane.xlu0 %2818
  %v2820 = vsel %vm2552, %v2630, -inf
  %2821 = vmax.xlane.f32.xlu0 %v2820
  %v2822 = vpop.xlane.xlu0 %2821
  %v2823 = vsel %vm2552, %v2633, -inf
  %2824 = vmax.xlane.f32.xlu0 %v2823
  %v2825 = vpop.xlane.xlu0 %2824
  %v2826 = vsel %vm2552, %v2636, -inf
  %2827 = vmax.xlane.f32.xlu0 %v2826
  %v2828 = vpop.xlane.xlu0 %2827
  %v2829 = vsel %vm2552, %v2639, -inf
  %2830 = vmax.xlane.f32.xlu0 %v2829
  %v2831 = vpop.xlane.xlu0 %2830
  %v2832 = vsel %vm2552, %v2642, -inf
  %2833 = vmax.xlane.f32.xlu0 %v2832
  %v2834 = vpop.xlane.xlu0 %2833
  %v2835 = vsel %vm2552, %v2645, -inf
  %2836 = vmax.xlane.f32.xlu0 %v2835
  %v2837 = vpop.xlane.xlu0 %2836
  %v2838 = vsel %vm2552, %v2648, -inf
  %2839 = vmax.xlane.f32.xlu0 %v2838
  %v2840 = vpop.xlane.xlu0 %2839
  %v2841 = vsel %vm2552, %v2651, -inf
  %2842 = vmax.xlane.f32.xlu0 %v2841
  %v2843 = vpop.xlane.xlu0 %2842
  %v2844 = vsel %vm2552, %v2654, -inf
  %2845 = vmax.xlane.f32.xlu0 %v2844
  %v2846 = vpop.xlane.xlu0 %2845
  %v2847 = vsel %vm2552, %v2657, -inf
  %2848 = vmax.xlane.f32.xlu0 %v2847
  %v2849 = vpop.xlane.xlu0 %2848
  %v2850 = vsel %vm2552, %v2660, -inf
  %2851 = vmax.xlane.f32.xlu0 %v2850
  %v2852 = vpop.xlane.xlu0 %2851
  %v2853 = vsel %vm2552, %v2663, -inf
  %2854 = vmax.xlane.f32.xlu0 %v2853
  %v2855 = vpop.xlane.xlu0 %2854
  %v2856 = vsel %vm2552, %v2666, -inf
  %2857 = vmax.xlane.f32.xlu0 %v2856
  %v2858 = vpop.xlane.xlu0 %2857
  %v2859 = vsel %vm2552, %v2669, -inf
  %2860 = vmax.xlane.f32.xlu0 %v2859
  %v2861 = vpop.xlane.xlu0 %2860
  %v2862 = vsel %vm2552, %v2672, -inf
  %2863 = vmax.xlane.f32.xlu0 %v2862
  %v2864 = vpop.xlane.xlu0 %2863
  %v2865 = vsel %vm2552, %v2675, -inf
  %2866 = vmax.xlane.f32.xlu0 %v2865
  %v2867 = vpop.xlane.xlu0 %2866
  %v2868 = vsel %vm2552, %v2678, -inf
  %2869 = vmax.xlane.f32.xlu0 %v2868
  %v2870 = vpop.xlane.xlu0 %2869
  %v2871 = vsel %vm2552, %v2681, -inf
  %2872 = vmax.xlane.f32.xlu0 %v2871
  %v2873 = vpop.xlane.xlu0 %2872
  %v2874 = vsel %vm2552, %v2684, -inf
  %2875 = vmax.xlane.f32.xlu0 %v2874
  %v2876 = vpop.xlane.xlu0 %2875
  %v2877 = vsel %vm2552, %v2687, -inf
  %2878 = vmax.xlane.f32.xlu0 %v2877
  %v2879 = vpop.xlane.xlu0 %2878
  %v2880 = vsel %vm2552, %v2690, -inf
  %2881 = vmax.xlane.f32.xlu0 %v2880
  %v2882 = vpop.xlane.xlu0 %2881
  %v2883 = vsel %vm2552, %v2693, -inf
  %2884 = vmax.xlane.f32.xlu0 %v2883
  %v2885 = vpop.xlane.xlu0 %2884
  %v2886 = vsel %vm2552, %v2696, -inf
  %2887 = vmax.xlane.f32.xlu0 %v2886
  %v2888 = vpop.xlane.xlu0 %2887
  %v2889 = vsel %vm2552, %v2699, -inf
  %2890 = vmax.xlane.f32.xlu0 %v2889
  %v2891 = vpop.xlane.xlu0 %2890
  %v2892 = vsel %vm2552, %v2702, -inf
  %2893 = vmax.xlane.f32.xlu0 %v2892
  %v2894 = vpop.xlane.xlu0 %2893
  %v2895 = vsel %vm2552, %v2705, -inf
  %2896 = vmax.xlane.f32.xlu0 %v2895
  %v2897 = vpop.xlane.xlu0 %2896
  %v2898 = vsel %vm2552, %v2708, -inf
  %2899 = vmax.xlane.f32.xlu0 %v2898
  %v2900 = vpop.xlane.xlu0 %2899
  %v2901 = vsel %vm2552, %v2711, -inf
  %2902 = vmax.xlane.f32.xlu0 %v2901
  %v2903 = vpop.xlane.xlu0 %2902
  %v2904 = vsel %vm2552, %v2714, -inf
  %2905 = vmax.xlane.f32.xlu0 %v2904
  %v2906 = vpop.xlane.xlu0 %2905
  %v2907 = vsel %vm2552, %v2717, -inf
  %2908 = vmax.xlane.f32.xlu0 %v2907
  %v2909 = vpop.xlane.xlu0 %2908
  %v2910 = vsel %vm2552, %v2720, -inf
  %2911 = vmax.xlane.f32.xlu0 %v2910
  %v2912 = vpop.xlane.xlu0 %2911
  %v2913 = vsel %vm2552, %v2723, -inf
  %2914 = vmax.xlane.f32.xlu0 %v2913
  %v2915 = vpop.xlane.xlu0 %2914
  %v2916 = vsel %vm2552, %v2726, -inf
  %2917 = vmax.xlane.f32.xlu0 %v2916
  %v2918 = vpop.xlane.xlu0 %2917
  %v2919 = vsel %vm2552, %v2729, -inf
  %2920 = vmax.xlane.f32.xlu0 %v2919
  %v2921 = vpop.xlane.xlu0 %2920
  %v2922 = vsel %vm2552, %v2732, -inf
  %2923 = vmax.xlane.f32.xlu0 %v2922
  %v2924 = vpop.xlane.xlu0 %2923
  %v2925 = vsel %vm2552, %v2735, -inf
  %2926 = vmax.xlane.f32.xlu0 %v2925
  %v2927 = vpop.xlane.xlu0 %2926
  %v2928 = vsel %vm2552, %v2738, -inf
  %2929 = vmax.xlane.f32.xlu0 %v2928
  %v2930 = vpop.xlane.xlu0 %2929
  %v2931 = vsel %vm2552, %v2741, -inf
  %2932 = vmax.xlane.f32.xlu0 %v2931
  %v2933 = vpop.xlane.xlu0 %2932
  %v2934 = vsel %vm2552, %v2744, -inf
  %2935 = vmax.xlane.f32.xlu0 %v2934
  %v2936 = vpop.xlane.xlu0 %2935
  %v3001 = vlaneseq
  %v3002 = vand.u32 %v3001, 127
  %v3003 = vlaneseq
  %v3004 = vshrl.u32 %v3003, 7
  %v3005 = vsub.s32 %v3002, %v3004
  %v3006 = vrot.slane %v2747, %v3005
  %v3007 = vlaneseq
  %v3008 = vshrl.u32 %v3007, 7
  %v3009 = vsub.s32 %v3002, %v3008
  %v3010 = vrot.slane %v2750, %v3009
  %v3011 = vlaneseq
  %v3012 = vshrl.u32 %v3011, 7
  %v3013 = vsub.s32 %v3002, %v3012
  %v3014 = vrot.slane %v2753, %v3013
  %v3015 = vlaneseq
  %v3016 = vshrl.u32 %v3015, 7
  %v3017 = vsub.s32 %v3002, %v3016
  %v3018 = vrot.slane %v2756, %v3017
  %v3019 = vlaneseq
  %v3020 = vshrl.u32 %v3019, 7
  %v3021 = vsub.s32 %v3002, %v3020
  %v3022 = vrot.slane %v2759, %v3021
  %v3023 = vlaneseq
  %v3024 = vshrl.u32 %v3023, 7
  %v3025 = vsub.s32 %v3002, %v3024
  %v3026 = vrot.slane %v2762, %v3025
  %v3027 = vlaneseq
  %v3028 = vshrl.u32 %v3027, 7
  %v3029 = vsub.s32 %v3002, %v3028
  %v3030 = vrot.slane %v2765, %v3029
  %v3031 = vlaneseq
  %v3032 = vshrl.u32 %v3031, 7
  %v3033 = vsub.s32 %v3002, %v3032
  %v3034 = vrot.slane %v2768, %v3033
  %v3035 = vlaneseq
  %v3036 = vshrl.u32 %v3035, 7
  %v3037 = vsub.s32 %v3002, %v3036
  %v3038 = vrot.slane %v2771, %v3037
  %v3039 = vlaneseq
  %v3040 = vshrl.u32 %v3039, 7
  %v3041 = vsub.s32 %v3002, %v3040
  %v3042 = vrot.slane %v2774, %v3041
  %v3043 = vlaneseq
  %v3044 = vshrl.u32 %v3043, 7
  %v3045 = vsub.s32 %v3002, %v3044
  %v3046 = vrot.slane %v2777, %v3045
  %v3047 = vlaneseq
  %v3048 = vshrl.u32 %v3047, 7
  %v3049 = vsub.s32 %v3002, %v3048
  %v3050 = vrot.slane %v2780, %v3049
  %v3051 = vlaneseq
  %v3052 = vshrl.u32 %v3051, 7
  %v3053 = vsub.s32 %v3002, %v3052
  %v3054 = vrot.slane %v2783, %v3053
  %v3055 = vlaneseq
  %v3056 = vshrl.u32 %v3055, 7
  %v3057 = vsub.s32 %v3002, %v3056
  %v3058 = vrot.slane %v2786, %v3057
  %v3059 = vlaneseq
  %v3060 = vshrl.u32 %v3059, 7
  %v3061 = vsub.s32 %v3002, %v3060
  %v3062 = vrot.slane %v2789, %v3061
  %v3063 = vlaneseq
  %v3064 = vshrl.u32 %v3063, 7
  %v3065 = vsub.s32 %v3002, %v3064
  %v3066 = vrot.slane %v2792, %v3065
  %v3067 = vlaneseq
  %v3068 = vshrl.u32 %v3067, 7
  %v3069 = vsub.s32 %v3002, %v3068
  %v3070 = vrot.slane %v2795, %v3069
  %v3071 = vlaneseq
  %v3072 = vshrl.u32 %v3071, 7
  %v3073 = vsub.s32 %v3002, %v3072
  %v3074 = vrot.slane %v2798, %v3073
  %v3075 = vlaneseq
  %v3076 = vshrl.u32 %v3075, 7
  %v3077 = vsub.s32 %v3002, %v3076
  %v3078 = vrot.slane %v2801, %v3077
  %v3079 = vlaneseq
  %v3080 = vshrl.u32 %v3079, 7
  %v3081 = vsub.s32 %v3002, %v3080
  %v3082 = vrot.slane %v2804, %v3081
  %v3083 = vlaneseq
  %v3084 = vshrl.u32 %v3083, 7
  %v3085 = vsub.s32 %v3002, %v3084
  %v3086 = vrot.slane %v2807, %v3085
  %v3087 = vlaneseq
  %v3088 = vshrl.u32 %v3087, 7
  %v3089 = vsub.s32 %v3002, %v3088
  %v3090 = vrot.slane %v2810, %v3089
  %v3091 = vlaneseq
  %v3092 = vshrl.u32 %v3091, 7
  %v3093 = vsub.s32 %v3002, %v3092
  %v3094 = vrot.slane %v2813, %v3093
  %v3095 = vlaneseq
  %v3096 = vshrl.u32 %v3095, 7
  %v3097 = vsub.s32 %v3002, %v3096
  %v3098 = vrot.slane %v2816, %v3097
  %v3099 = vlaneseq
  %v3100 = vshrl.u32 %v3099, 7
  %v3101 = vsub.s32 %v3002, %v3100
  %v3102 = vrot.slane %v2819, %v3101
  %v3103 = vlaneseq
  %v3104 = vshrl.u32 %v3103, 7
  %v3105 = vsub.s32 %v3002, %v3104
  %v3106 = vrot.slane %v2822, %v3105
  %v3107 = vlaneseq
  %v3108 = vshrl.u32 %v3107, 7
  %v3109 = vsub.s32 %v3002, %v3108
  %v3110 = vrot.slane %v2825, %v3109
  %v3111 = vlaneseq
  %v3112 = vshrl.u32 %v3111, 7
  %v3113 = vsub.s32 %v3002, %v3112
  %v3114 = vrot.slane %v2828, %v3113
  %v3115 = vlaneseq
  %v3116 = vshrl.u32 %v3115, 7
  %v3117 = vsub.s32 %v3002, %v3116
  %v3118 = vrot.slane %v2831, %v3117
  %v3119 = vlaneseq
  %v3120 = vshrl.u32 %v3119, 7
  %v3121 = vsub.s32 %v3002, %v3120
  %v3122 = vrot.slane %v2834, %v3121
  %v3123 = vlaneseq
  %v3124 = vshrl.u32 %v3123, 7
  %v3125 = vsub.s32 %v3002, %v3124
  %v3126 = vrot.slane %v2837, %v3125
  %v3127 = vlaneseq
  %v3128 = vshrl.u32 %v3127, 7
  %v3129 = vsub.s32 %v3002, %v3128
  %v3130 = vrot.slane %v2840, %v3129
  %v3131 = vlaneseq
  %v3132 = vshrl.u32 %v3131, 7
  %v3133 = vsub.s32 %v3002, %v3132
  %v3134 = vrot.slane %v2843, %v3133
  %v3135 = vlaneseq
  %v3136 = vshrl.u32 %v3135, 7
  %v3137 = vsub.s32 %v3002, %v3136
  %v3138 = vrot.slane %v2846, %v3137
  %v3139 = vlaneseq
  %v3140 = vshrl.u32 %v3139, 7
  %v3141 = vsub.s32 %v3002, %v3140
  %v3142 = vrot.slane %v2849, %v3141
  %v3143 = vlaneseq
  %v3144 = vshrl.u32 %v3143, 7
  %v3145 = vsub.s32 %v3002, %v3144
  %v3146 = vrot.slane %v2852, %v3145
  %v3147 = vlaneseq
  %v3148 = vshrl.u32 %v3147, 7
  %v3149 = vsub.s32 %v3002, %v3148
  %v3150 = vrot.slane %v2855, %v3149
  %v3151 = vlaneseq
  %v3152 = vshrl.u32 %v3151, 7
  %v3153 = vsub.s32 %v3002, %v3152
  %v3154 = vrot.slane %v2858, %v3153
  %v3155 = vlaneseq
  %v3156 = vshrl.u32 %v3155, 7
  %v3157 = vsub.s32 %v3002, %v3156
  %v3158 = vrot.slane %v2861, %v3157
  %v3159 = vlaneseq
  %v3160 = vshrl.u32 %v3159, 7
  %v3161 = vsub.s32 %v3002, %v3160
  %v3162 = vrot.slane %v2864, %v3161
  %v3163 = vlaneseq
  %v3164 = vshrl.u32 %v3163, 7
  %v3165 = vsub.s32 %v3002, %v3164
  %v3166 = vrot.slane %v2867, %v3165
  %v3167 = vlaneseq
  %v3168 = vshrl.u32 %v3167, 7
  %v3169 = vsub.s32 %v3002, %v3168
  %v3170 = vrot.slane %v2870, %v3169
  %v3171 = vlaneseq
  %v3172 = vshrl.u32 %v3171, 7
  %v3173 = vsub.s32 %v3002, %v3172
  %v3174 = vrot.slane %v2873, %v3173
  %v3175 = vlaneseq
  %v3176 = vshrl.u32 %v3175, 7
  %v3177 = vsub.s32 %v3002, %v3176
  %v3178 = vrot.slane %v2876, %v3177
  %v3179 = vlaneseq
  %v3180 = vshrl.u32 %v3179, 7
  %v3181 = vsub.s32 %v3002, %v3180
  %v3182 = vrot.slane %v2879, %v3181
  %v3183 = vlaneseq
  %v3184 = vshrl.u32 %v3183, 7
  %v3185 = vsub.s32 %v3002, %v3184
  %v3186 = vrot.slane %v2882, %v3185
  %v3187 = vlaneseq
  %v3188 = vshrl.u32 %v3187, 7
  %v3189 = vsub.s32 %v3002, %v3188
  %v3190 = vrot.slane %v2885, %v3189
  %v3191 = vlaneseq
  %v3192 = vshrl.u32 %v3191, 7
  %v3193 = vsub.s32 %v3002, %v3192
  %v3194 = vrot.slane %v2888, %v3193
  %v3195 = vlaneseq
  %v3196 = vshrl.u32 %v3195, 7
  %v3197 = vsub.s32 %v3002, %v3196
  %v3198 = vrot.slane %v2891, %v3197
  %v3199 = vlaneseq
  %v3200 = vshrl.u32 %v3199, 7
  %v3201 = vsub.s32 %v3002, %v3200
  %v3202 = vrot.slane %v2894, %v3201
  %v3203 = vlaneseq
  %v3204 = vshrl.u32 %v3203, 7
  %v3205 = vsub.s32 %v3002, %v3204
  %v3206 = vrot.slane %v2897, %v3205
  %v3207 = vlaneseq
  %v3208 = vshrl.u32 %v3207, 7
  %v3209 = vsub.s32 %v3002, %v3208
  %v3210 = vrot.slane %v2900, %v3209
  %v3211 = vlaneseq
  %v3212 = vshrl.u32 %v3211, 7
  %v3213 = vsub.s32 %v3002, %v3212
  %v3214 = vrot.slane %v2903, %v3213
  %v3215 = vlaneseq
  %v3216 = vshrl.u32 %v3215, 7
  %v3217 = vsub.s32 %v3002, %v3216
  %v3218 = vrot.slane %v2906, %v3217
  %v3219 = vlaneseq
  %v3220 = vshrl.u32 %v3219, 7
  %v3221 = vsub.s32 %v3002, %v3220
  %v3222 = vrot.slane %v2909, %v3221
  %v3223 = vlaneseq
  %v3224 = vshrl.u32 %v3223, 7
  %v3225 = vsub.s32 %v3002, %v3224
  %v3226 = vrot.slane %v2912, %v3225
  %v3227 = vlaneseq
  %v3228 = vshrl.u32 %v3227, 7
  %v3229 = vsub.s32 %v3002, %v3228
  %v3230 = vrot.slane %v2915, %v3229
  %v3231 = vlaneseq
  %v3232 = vshrl.u32 %v3231, 7
  %v3233 = vsub.s32 %v3002, %v3232
  %v3234 = vrot.slane %v2918, %v3233
  %v3235 = vlaneseq
  %v3236 = vshrl.u32 %v3235, 7
  %v3237 = vsub.s32 %v3002, %v3236
  %v3238 = vrot.slane %v2921, %v3237
  %v3239 = vlaneseq
  %v3240 = vshrl.u32 %v3239, 7
  %v3241 = vsub.s32 %v3002, %v3240
  %v3242 = vrot.slane %v2924, %v3241
  %v3243 = vlaneseq
  %v3244 = vshrl.u32 %v3243, 7
  %v3245 = vsub.s32 %v3002, %v3244
  %v3246 = vrot.slane %v2927, %v3245
  %v3247 = vlaneseq
  %v3248 = vshrl.u32 %v3247, 7
  %v3249 = vsub.s32 %v3002, %v3248
  %v3250 = vrot.slane %v2930, %v3249
  %v3251 = vlaneseq
  %v3252 = vshrl.u32 %v3251, 7
  %v3253 = vsub.s32 %v3002, %v3252
  %v3254 = vrot.slane %v2933, %v3253
  %v3255 = vlaneseq
  %v3256 = vshrl.u32 %v3255, 7
  %v3257 = vsub.s32 %v3002, %v3256
  %v3258 = vrot.slane %v2936, %v3257
  %vm3259 = vcmask 1041409
  %v3260 = vsel %vm3259, %v3010, %v3006
  %vm3261 = vcmask 1042434
  %v3262 = vsel %vm3261, %v3014, %v3260
  %vm3263 = vcmask 1043459
  %v3264 = vsel %vm3263, %v3018, %v3262
  %vm3265 = vcmask 1044484
  %v3266 = vsel %vm3265, %v3022, %v3264
  %vm3267 = vcmask 1045509
  %v3268 = vsel %vm3267, %v3026, %v3266
  %vm3269 = vcmask 1046534
  %v3270 = vsel %vm3269, %v3030, %v3268
  %vm3271 = vcmask 1047559
  %v3272 = vsel %vm3271, %v3034, %v3270
  %v3273 = vsel %vm3259, %v3042, %v3038
  %v3274 = vsel %vm3261, %v3046, %v3273
  %v3275 = vsel %vm3263, %v3050, %v3274
  %v3276 = vsel %vm3265, %v3054, %v3275
  %v3277 = vsel %vm3267, %v3058, %v3276
  %v3278 = vsel %vm3269, %v3062, %v3277
  %v3279 = vsel %vm3271, %v3066, %v3278
  %v3280 = vsel %vm3259, %v3074, %v3070
  %v3281 = vsel %vm3261, %v3078, %v3280
  %v3282 = vsel %vm3263, %v3082, %v3281
  %v3283 = vsel %vm3265, %v3086, %v3282
  %v3284 = vsel %vm3267, %v3090, %v3283
  %v3285 = vsel %vm3269, %v3094, %v3284
  %v3286 = vsel %vm3271, %v3098, %v3285
  %v3287 = vsel %vm3259, %v3106, %v3102
  %v3288 = vsel %vm3261, %v3110, %v3287
  %v3289 = vsel %vm3263, %v3114, %v3288
  %v3290 = vsel %vm3265, %v3118, %v3289
  %v3291 = vsel %vm3267, %v3122, %v3290
  %v3292 = vsel %vm3269, %v3126, %v3291
  %v3293 = vsel %vm3271, %v3130, %v3292
  %v3294 = vsel %vm3259, %v3138, %v3134
  %v3295 = vsel %vm3261, %v3142, %v3294
  %v3296 = vsel %vm3263, %v3146, %v3295
  %v3297 = vsel %vm3265, %v3150, %v3296
  %v3298 = vsel %vm3267, %v3154, %v3297
  %v3299 = vsel %vm3269, %v3158, %v3298
  %v3300 = vsel %vm3271, %v3162, %v3299
  %v3301 = vsel %vm3259, %v3170, %v3166
  %v3302 = vsel %vm3261, %v3174, %v3301
  %v3303 = vsel %vm3263, %v3178, %v3302
  %v3304 = vsel %vm3265, %v3182, %v3303
  %v3305 = vsel %vm3267, %v3186, %v3304
  %v3306 = vsel %vm3269, %v3190, %v3305
  %v3307 = vsel %vm3271, %v3194, %v3306
  %v3308 = vsel %vm3259, %v3202, %v3198
  %v3309 = vsel %vm3261, %v3206, %v3308
  %v3310 = vsel %vm3263, %v3210, %v3309
  %v3311 = vsel %vm3265, %v3214, %v3310
  %v3312 = vsel %vm3267, %v3218, %v3311
  %v3313 = vsel %vm3269, %v3222, %v3312
  %v3314 = vsel %vm3271, %v3226, %v3313
  %v3315 = vsel %vm3259, %v3234, %v3230
  %v3316 = vsel %vm3261, %v3238, %v3315
  %v3317 = vsel %vm3263, %v3242, %v3316
  %v3318 = vsel %vm3265, %v3246, %v3317
  %v3319 = vsel %vm3267, %v3250, %v3318
  %v3320 = vsel %vm3269, %v3254, %v3319
  %v3321 = vsel %vm3271, %v3258, %v3320
  %vm3330 = vcmask 64512
  %3331 = vst.msk [vmem:[%s1] sm:$0xff] %vm3330, %v3272
  %3332 = vst.msk [vmem:[%s1 + $0x8] sm:$0xff] %vm3330, %v3279
  %3333 = vst.msk [vmem:[%s1 + $0x10] sm:$0xff] %vm3330, %v3286
  %3334 = vst.msk [vmem:[%s1 + $0x18] sm:$0xff] %vm3330, %v3293
  %3335 = vst.msk [vmem:[%s1 + $0x20] sm:$0xff] %vm3330, %v3300
  %3336 = vst.msk [vmem:[%s1 + $0x28] sm:$0xff] %vm3330, %v3307
  %3337 = vst.msk [vmem:[%s1 + $0x30] sm:$0xff] %vm3330, %v3314
  %3338 = vst.msk [vmem:[%s1 + $0x38] sm:$0xff] %vm3330, %v3321
  // Predicated region
  $region6: #{tpu_custom_call.1} parent=0 // pred_check
    _
  $region7: #{tpu_custom_call.1} parent=0 // pred_check_branch
    %3340 = sbr.rel (0) target = $region9
  $region8: #{tpu_custom_call.1} parent=0 // pred_region
    _
  $region9: #{tpu_custom_call.1} parent=0 // pred_fallthru
    _
  // Predicated region
  $region10: #{tpu_custom_call.1} parent=0 // pred_check
    _
  $region11: #{tpu_custom_call.1} parent=0 // pred_check_branch
    %3342 = sbr.rel (0) target = $region13
  $region12: #{tpu_custom_call.1} parent=0 // pred_region
    _
  $region13: #{tpu_custom_call.1} parent=0 // pred_fallthru
    _

</llo_original>
